<compile_context>
chip_gen: v5e
topology: v5e:2x2
jax: 0.10.0
libtpu: 0.0.40
codegen_flags: <defaults>
</compile_context>

<pallas_src>
import jax
import jax.numpy as jnp
import numpy as np
from jax.experimental import pallas as pl
from jax.experimental.pallas import tpu as pltpu


# ------------------------------ fused kernel ---------------------------------
def fused_graph_kernel(adj_ref, x_ref, t_ref,
                       w0_ref, b0_ref, w1_ref, b1_ref,
                       wfc1h_ref, wfc1t_ref, bfc1_ref,
                       wfc2_ref, bfc2_ref, wfc3_ref, bfc3_ref,
                       o_ref, hflat_ref):
    TB, N, A = x_ref.shape          # block of TB batch elements
    L2 = w0_ref.shape[1]
    L1 = w1_ref.shape[1]

    adj = adj_ref[...]              # (TB, N, N)  f32
    x = x_ref[...]                  # (TB, N, A)  f32

    # ---- GNN layer 0: sigmoid(adj @ (x @ W0) + b0)   (reassociated) ---------
    # Weight matmul as one flat 2-D matmul: M = TB*N rows, weight stationary.
    xw0 = jnp.dot(x.reshape(TB * N, A), w0_ref[...],
                  preferred_element_type=jnp.float32).reshape(TB, N, L2)
    h = jnp.einsum('bij,bjo->bio', adj, xw0,
                   preferred_element_type=jnp.float32)          # (TB, N, L2)
    h = jax.nn.sigmoid(h + b0_ref[...])

    # ---- GNN layer 1: sigmoid(adj @ (h @ W1) + b1) ---------------------------
    hw1 = jnp.dot(h.reshape(TB * N, L2), w1_ref[...],
                  preferred_element_type=jnp.float32).reshape(TB, N, L1)
    h = jnp.einsum('bij,bjo->bio', adj, hw1,
                   preferred_element_type=jnp.float32)          # (TB, N, L1)
    h = jax.nn.sigmoid(h + b1_ref[...])                         # (TB, N, L1) f32

    # ---- flatten (PyTorch x.view(B, -1)) into a lane-dense bf16 scratch slab.
    # N static lane-slice stores instead of a sublane->lane merging reshape;
    # result feeds fc1 as a single K = N*L1 contraction.
    for n in range(N):              # static unroll, N is small
        hflat_ref[:, n * L1:(n + 1) * L1] = h[:, n, :].astype(jnp.bfloat16)
    hflat = hflat_ref[...]          # (TB, N*L1) bf16

    # ---- fc1: one (TB, N*L1) @ (N*L1, 1024) MXU matmul; t is a rank-1 f32 term
    z = bfc1_ref[...] + t_ref[...] * wfc1t_ref[...]             # (TB, 1024) f32
    z = z + jnp.dot(hflat, wfc1h_ref[...],
                    preferred_element_type=jnp.float32)
    z = jnp.maximum(z, 0.0)

    # ---- fc2 + ReLU ----------------------------------------------------------
    z = jnp.dot(z.astype(jnp.bfloat16), wfc2_ref[...],
                preferred_element_type=jnp.float32) + bfc2_ref[...]
    z = jnp.maximum(z, 0.0)                                     # (TB, 128) f32

    # ---- fc3 as VPU multiply + lane reduction (no 1-column MXU matmul) ------
    z = jnp.sum(z * wfc3_ref[...], axis=-1, keepdims=True) + bfc3_ref[...]

    o_ref[...] = z                                              # (TB, 1)


def _pick_batch_tile(B):
    divisors = [tb for tb in (256, 128, 64, 32, 16, 8, 4, 2, 1)
                if tb <= B and B % tb == 0]
    for tb in divisors:
        # Fill the MXU M dim, but keep >= 2 grid steps so both v7x TCs get work.
        if tb >= 8 and B // tb >= 2:
            return tb
    return divisors[0]   # small B: one big step (launch/DMA bound anyway)


def _full_spec(shape):
    nd = len(shape)
    return pl.BlockSpec(shape, lambda b, _nd=nd: (0,) * _nd)


# ------------------------------- full forward --------------------------------
def graph_model_forward(params, node_attr_matrix, adjacency_matrix, t_matrix):
    node_attr = node_attr_matrix.astype(jnp.float32)
    adj = adjacency_matrix.astype(jnp.float32)
    t = t_matrix.astype(jnp.float32)

    B, N, A = node_attr.shape
    L2 = params["w_dense0"].shape[1]
    L1 = params["w_dense1"].shape[1]
    H1 = params["w_fc1"].shape[1]          # 1024
    H2 = params["w_fc2"].shape[1]          # 128

    # fc1 weight prep (cheap XLA-side): node rows -> (N*L1, H1) bf16 so the
    # kernel does one K=N*L1 contraction; the t column stays a separate f32 row.
    wfc1 = params["w_fc1"]
    wfc1h = wfc1[:N * L1].astype(jnp.bfloat16)       # (N*L1, H1)
    wfc1t = wfc1[N * L1:N * L1 + 1]                  # (1, H1) f32
    wfc2 = params["w_fc2"].astype(jnp.bfloat16)      # (H1, H2)
    wfc3 = params["w_fc3"].reshape(1, H2)            # (1, H2) f32, row form

    tb = _pick_batch_tile(B)
    grid = (B // tb,)

    in_specs = [
        pl.BlockSpec((tb, N, N), lambda b: (b, 0, 0)),   # adjacency
        pl.BlockSpec((tb, N, A), lambda b: (b, 0, 0)),   # node attrs
        pl.BlockSpec((tb, 1), lambda b: (b, 0)),         # t
        _full_spec((A, L2)),                             # w_dense0 (f32)
        _full_spec((1, L2)),                             # b_dense0
        _full_spec((L2, L1)),                            # w_dense1 (f32)
        _full_spec((1, L1)),                             # b_dense1
        _full_spec((N * L1, H1)),                        # w_fc1 node part (bf16)
        _full_spec((1, H1)),                             # w_fc1 t row (f32)
        _full_spec((1, H1)),                             # b_fc1
        _full_spec((H1, H2)),                            # w_fc2 (bf16)
        _full_spec((1, H2)),                             # b_fc2
        _full_spec((1, H2)),                             # w_fc3 row (f32)
        _full_spec((1, 1)),                              # b_fc3
    ]
    out_specs = pl.BlockSpec((tb, 1), lambda b: (b, 0))

    flops_per_b = (2 * N * A * L2 + 2 * N * N * L2
                   + 2 * N * L2 * L1 + 2 * N * N * L1
                   + 2 * (N * L1 + 1) * H1 + 2 * H1 * H2 + 2 * H2)
    weight_bytes = (wfc1h.size * 2 + wfc2.size * 2
                    + (params["w_dense0"].size + params["w_dense1"].size
                       + wfc1t.size + wfc3.size) * 4
                    + (L2 + L1 + H1 + H2 + 1) * 4)
    cost = pl.CostEstimate(
        flops=B * flops_per_b,
        transcendentals=B * N * (L2 + L1),
        bytes_accessed=B * (N * N + N * A + 2) * 4 + weight_bytes,
    )

    # NOTE: total VMEM footprint (weights ~0.6 MB + per-step blocks) stays far
    # under the scoped-VMEM default on v5e/v6e/v7x even at tb=256, so no
    # explicit vmem_limit_bytes is needed at these shapes.
    return pl.pallas_call(
        fused_graph_kernel,
        out_shape=jax.ShapeDtypeStruct((B, 1), jnp.float32),
        grid_spec=pltpu.PrefetchScalarGridSpec(
            num_scalar_prefetch=0,
            grid=grid,
            in_specs=in_specs,
            out_specs=out_specs,
            scratch_shapes=[pltpu.VMEM((tb, N * L1), jnp.bfloat16)],
        ),
        compiler_params=pltpu.CompilerParams(
            dimension_semantics=("parallel",),
        ),
        cost_estimate=cost,
    )(adj, node_attr, t,
      params["w_dense0"], params["b_dense0"],
      params["w_dense1"], params["b_dense1"],
      wfc1h, wfc1t, params["b_fc1"],
      wfc2, params["b_fc2"], wfc3, params["b_fc3"])


# ------------------------------ pure-JAX reference ----------------------------
def reference_forward(params, node_attr, adj, t):
    x = node_attr.astype(jnp.float32)
    adj = adj.astype(jnp.float32)
    x = jnp.einsum("bij,bjk->bik", adj, x)
    x = jax.nn.sigmoid(x @ params["w_dense0"] + params["b_dense0"][0])
    x = jnp.einsum("bij,bjk->bik", adj, x)
    x = jax.nn.sigmoid(x @ params["w_dense1"] + params["b_dense1"][0])
    x = x.reshape(x.shape[0], -1)
    x = jnp.concatenate([x, t.astype(jnp.float32)], axis=1)
    x = jnp.maximum(x @ params["w_fc1"] + params["b_fc1"][0], 0.0)
    x = jnp.maximum(x @ params["w_fc2"] + params["b_fc2"][0], 0.0)
    x = x @ params["w_fc3"] + params["b_fc3"][0]
    return x


def init_params(key, max_node_num, atom_attr_dim, latent_dim1, latent_dim2):
    ks = jax.random.split(key, 5)
    fc_in = max_node_num * latent_dim1 + 1

    def lin(k, fan_in, fan_out):
        kw, kb = jax.random.split(k)
        bound = 1.0 / np.sqrt(fan_in)
        w = jax.random.uniform(kw, (fan_in, fan_out), jnp.float32, -bound, bound)
        b = jax.random.uniform(kb, (1, fan_out), jnp.float32, -bound, bound)
        return w, b

    p = {}
    p["w_dense0"], p["b_dense0"] = lin(ks[0], atom_attr_dim, latent_dim2)
    p["w_dense1"], p["b_dense1"] = lin(ks[1], latent_dim2, latent_dim1)
    p["w_fc1"], p["b_fc1"] = lin(ks[2], fc_in, 1024)
    p["w_fc2"], p["b_fc2"] = lin(ks[3], 1024, 128)
    p["w_fc3"], p["b_fc3"] = lin(ks[4], 128, 1)
    return p


if __name__ == "__main__":
    # Small shapes consistent with the module (N * L1 == 128 -> lane-dense fc1 K).
    B = 2
    MAX_NODE_NUM = 8
    ATOM_ATTR_DIM = 16
    LATENT_DIM1 = 16
    LATENT_DIM2 = 32

    key = jax.random.PRNGKey(0)
    k_param, k_node, k_adj, k_t = jax.random.split(key, 4)

    params = init_params(k_param, MAX_NODE_NUM, ATOM_ATTR_DIM, LATENT_DIM1, LATENT_DIM2)

    node_attr = jax.random.normal(k_node, (B, MAX_NODE_NUM, ATOM_ATTR_DIM), jnp.float32)
    adjacency = (jax.random.uniform(k_adj, (B, MAX_NODE_NUM, MAX_NODE_NUM)) > 0.5).astype(jnp.float32)
    t_matrix = jax.random.normal(k_t, (B, 1), jnp.float32)

    fwd = jax.jit(graph_model_forward)
    out = jax.block_until_ready(fwd(params, node_attr, adjacency, t_matrix))

    ref = jax.block_until_ready(reference_forward(params, node_attr, adjacency, t_matrix))
    # fc1/fc2 use bf16 MXU inputs (f32 accumulation), so tolerance is loosened
    # vs. the all-f32 version.
    np.testing.assert_allclose(np.asarray(out), np.asarray(ref), atol=2e-2, rtol=2e-2)

    print("KERNEL_OK")
</pallas_src>

<mosaic_0001>
module attributes {stable_mosaic.version = 11 : i64} {
  func.func @fused_graph_kernel(%arg0: i32, %arg1: memref<2x8x8xf32, #tpu.memory_space<vmem>>, %arg2: memref<2x8x16xf32, #tpu.memory_space<vmem>>, %arg3: memref<2x1xf32, #tpu.memory_space<vmem>>, %arg4: memref<16x32xf32, #tpu.memory_space<vmem>>, %arg5: memref<1x32xf32, #tpu.memory_space<vmem>>, %arg6: memref<32x16xf32, #tpu.memory_space<vmem>>, %arg7: memref<1x16xf32, #tpu.memory_space<vmem>>, %arg8: memref<128x1024xbf16, #tpu.memory_space<vmem>>, %arg9: memref<1x1024xf32, #tpu.memory_space<vmem>>, %arg10: memref<1x1024xf32, #tpu.memory_space<vmem>>, %arg11: memref<1024x128xbf16, #tpu.memory_space<vmem>>, %arg12: memref<1x128xf32, #tpu.memory_space<vmem>>, %arg13: memref<1x128xf32, #tpu.memory_space<vmem>>, %arg14: memref<1x1xf32, #tpu.memory_space<vmem>>, %arg15: memref<2x1xf32, #tpu.memory_space<vmem>>, %arg16: memref<2x128xbf16, #tpu.memory_space<vmem>>) attributes {dimension_semantics = [#tpu.dimension_semantics<parallel>], iteration_bounds = array<i64: 1>, scalar_prefetch = 0 : i64, scratch_operands = 1 : i64, tpu.core_type = #tpu.core_type<tc>, window_params = [{transform_indices = @transform_0, window_bounds = array<i64: 2, 8, 8>}, {transform_indices = @transform_1, window_bounds = array<i64: 2, 8, 16>}, {transform_indices = @transform_2, window_bounds = array<i64: 2, 1>}, {pipeline_mode = #tpu.pipeline_mode<synchronous>, transform_indices = @transform_3, window_bounds = array<i64: 16, 32>}, {pipeline_mode = #tpu.pipeline_mode<synchronous>, transform_indices = @transform_4, window_bounds = array<i64: 1, 32>}, {pipeline_mode = #tpu.pipeline_mode<synchronous>, transform_indices = @transform_5, window_bounds = array<i64: 32, 16>}, {pipeline_mode = #tpu.pipeline_mode<synchronous>, transform_indices = @transform_6, window_bounds = array<i64: 1, 16>}, {pipeline_mode = #tpu.pipeline_mode<synchronous>, transform_indices = @transform_7, window_bounds = array<i64: 128, 1024>}, {pipeline_mode = #tpu.pipeline_mode<synchronous>, transform_indices = @transform_8, window_bounds = array<i64: 1, 1024>}, {pipeline_mode = #tpu.pipeline_mode<synchronous>, transform_indices = @transform_9, window_bounds = array<i64: 1, 1024>}, {pipeline_mode = #tpu.pipeline_mode<synchronous>, transform_indices = @transform_10, window_bounds = array<i64: 1024, 128>}, {pipeline_mode = #tpu.pipeline_mode<synchronous>, transform_indices = @transform_11, window_bounds = array<i64: 1, 128>}, {pipeline_mode = #tpu.pipeline_mode<synchronous>, transform_indices = @transform_12, window_bounds = array<i64: 1, 128>}, {pipeline_mode = #tpu.pipeline_mode<synchronous>, transform_indices = @transform_13, window_bounds = array<i64: 1, 1>}, {transform_indices = @transform_14, window_bounds = array<i64: 2, 1>}]} {
    %c0 = arith.constant 0 : index
    %c0_0 = arith.constant 0 : index
    %c0_1 = arith.constant 0 : index
    %0 = vector.load %arg1[%c0, %c0_0, %c0_1] : memref<2x8x8xf32, #tpu.memory_space<vmem>>, vector<2x8x8xf32>
    %c0_2 = arith.constant 0 : index
    %c0_3 = arith.constant 0 : index
    %c0_4 = arith.constant 0 : index
    %1 = vector.load %arg2[%c0_2, %c0_3, %c0_4] : memref<2x8x16xf32, #tpu.memory_space<vmem>>, vector<2x8x16xf32>
    %2 = vector.shape_cast %1 : vector<2x8x16xf32> to vector<16x16xf32>
    %c0_5 = arith.constant 0 : index
    %c0_6 = arith.constant 0 : index
    %3 = vector.load %arg4[%c0_5, %c0_6] : memref<16x32xf32, #tpu.memory_space<vmem>>, vector<16x32xf32>
    %cst = arith.constant dense<0.000000e+00> : vector<16x32xf32>
    %4 = tpu.matmul %2, %3, %cst {dimension_numbers = #tpu.dot_dimension_numbers<[1], [0], [0], [1], [0, 0, 1, 1], [], []>} : vector<16x16xf32>, vector<16x32xf32>, vector<16x32xf32> -> vector<16x32xf32>
    %5 = vector.shape_cast %4 : vector<16x32xf32> to vector<2x8x32xf32>
    "tpu.trace_start"() <{level = 10 : i32, message = "bij,bjo->bio"}> : () -> ()
    %cst_7 = arith.constant dense<0.000000e+00> : vector<2x8x32xf32>
    %6 = tpu.matmul %0, %5, %cst_7 {dimension_numbers = #tpu.dot_dimension_numbers<[2], [1], [1], [2], [0, 0, 0, 1, 1, 2], [0], [0]>} : vector<2x8x8xf32>, vector<2x8x32xf32>, vector<2x8x32xf32> -> vector<2x8x32xf32>
    "tpu.trace_stop"() : () -> ()
    %c0_8 = arith.constant 0 : index
    %c0_9 = arith.constant 0 : index
    %7 = vector.load %arg5[%c0_8, %c0_9] : memref<1x32xf32, #tpu.memory_space<vmem>>, vector<1x32xf32>
    %8 = vector.shape_cast %7 : vector<1x32xf32> to vector<1x1x32xf32>
    %9 = vector.broadcast %8 : vector<1x1x32xf32> to vector<2x8x32xf32>
    %10 = arith.addf %6, %9 : vector<2x8x32xf32>
    %11 = arith.negf %10 : vector<2x8x32xf32>
    %12 = math.exp %11 : vector<2x8x32xf32>
    %cst_10 = arith.constant 1.000000e+00 : f32
    %13 = vector.broadcast %cst_10 : f32 to vector<2x8x32xf32>
    %14 = arith.addf %13, %12 : vector<2x8x32xf32>
    %15 = arith.divf %13, %14 : vector<2x8x32xf32>
    %16 = vector.shape_cast %15 : vector<2x8x32xf32> to vector<16x32xf32>
    %c0_11 = arith.constant 0 : index
    %c0_12 = arith.constant 0 : index
    %17 = vector.load %arg6[%c0_11, %c0_12] : memref<32x16xf32, #tpu.memory_space<vmem>>, vector<32x16xf32>
    %cst_13 = arith.constant dense<0.000000e+00> : vector<16x16xf32>
    %18 = tpu.matmul %16, %17, %cst_13 {dimension_numbers = #tpu.dot_dimension_numbers<[1], [0], [0], [1], [0, 0, 1, 1], [], []>} : vector<16x32xf32>, vector<32x16xf32>, vector<16x16xf32> -> vector<16x16xf32>
    %19 = vector.shape_cast %18 : vector<16x16xf32> to vector<2x8x16xf32>
    "tpu.trace_start"() <{level = 10 : i32, message = "bij,bjo->bio"}> : () -> ()
    %cst_14 = arith.constant dense<0.000000e+00> : vector<2x8x16xf32>
    %20 = tpu.matmul %0, %19, %cst_14 {dimension_numbers = #tpu.dot_dimension_numbers<[2], [1], [1], [2], [0, 0, 0, 1, 1, 2], [0], [0]>} : vector<2x8x8xf32>, vector<2x8x16xf32>, vector<2x8x16xf32> -> vector<2x8x16xf32>
    "tpu.trace_stop"() : () -> ()
    %c0_15 = arith.constant 0 : index
    %c0_16 = arith.constant 0 : index
    %21 = vector.load %arg7[%c0_15, %c0_16] : memref<1x16xf32, #tpu.memory_space<vmem>>, vector<1x16xf32>
    %22 = vector.shape_cast %21 : vector<1x16xf32> to vector<1x1x16xf32>
    %23 = vector.broadcast %22 : vector<1x1x16xf32> to vector<2x8x16xf32>
    %24 = arith.addf %20, %23 : vector<2x8x16xf32>
    %25 = arith.negf %24 : vector<2x8x16xf32>
    %26 = math.exp %25 : vector<2x8x16xf32>
    %cst_17 = arith.constant 1.000000e+00 : f32
    %27 = vector.broadcast %cst_17 : f32 to vector<2x8x16xf32>
    %28 = arith.addf %27, %26 : vector<2x8x16xf32>
    %29 = arith.divf %27, %28 : vector<2x8x16xf32>
    %30 = vector.extract_strided_slice %29 {offsets = [0, 0, 0], sizes = [2, 1, 16], strides = [1, 1, 1]} : vector<2x8x16xf32> to vector<2x1x16xf32>
    %31 = vector.shape_cast %30 : vector<2x1x16xf32> to vector<2x16xf32>
    %32 = arith.truncf %31 : vector<2x16xf32> to vector<2x16xbf16>
    %c0_18 = arith.constant 0 : index
    %c0_19 = arith.constant 0 : index
    %33 = vector.load %arg16[%c0_18, %c0_19] : memref<2x128xbf16, #tpu.memory_space<vmem>>, vector<2x16xbf16>
    tpu.vector_store %arg16[%c0_18, %c0_19], %32 {strides = array<i32>} : memref<2x128xbf16, #tpu.memory_space<vmem>>, vector<2x16xbf16>,
    %34 = vector.extract_strided_slice %29 {offsets = [0, 1, 0], sizes = [2, 1, 16], strides = [1, 1, 1]} : vector<2x8x16xf32> to vector<2x1x16xf32>
    %35 = vector.shape_cast %34 : vector<2x1x16xf32> to vector<2x16xf32>
    %36 = arith.truncf %35 : vector<2x16xf32> to vector<2x16xbf16>
    %c0_20 = arith.constant 0 : index
    %c16 = arith.constant 16 : index
    %37 = vector.load %arg16[%c0_20, %c16] : memref<2x128xbf16, #tpu.memory_space<vmem>>, vector<2x16xbf16>
    tpu.vector_store %arg16[%c0_20, %c16], %36 {strides = array<i32>} : memref<2x128xbf16, #tpu.memory_space<vmem>>, vector<2x16xbf16>,
    %38 = vector.extract_strided_slice %29 {offsets = [0, 2, 0], sizes = [2, 1, 16], strides = [1, 1, 1]} : vector<2x8x16xf32> to vector<2x1x16xf32>
    %39 = vector.shape_cast %38 : vector<2x1x16xf32> to vector<2x16xf32>
    %40 = arith.truncf %39 : vector<2x16xf32> to vector<2x16xbf16>
    %c0_21 = arith.constant 0 : index
    %c32 = arith.constant 32 : index
    %41 = vector.load %arg16[%c0_21, %c32] : memref<2x128xbf16, #tpu.memory_space<vmem>>, vector<2x16xbf16>
    tpu.vector_store %arg16[%c0_21, %c32], %40 {strides = array<i32>} : memref<2x128xbf16, #tpu.memory_space<vmem>>, vector<2x16xbf16>,
    %42 = vector.extract_strided_slice %29 {offsets = [0, 3, 0], sizes = [2, 1, 16], strides = [1, 1, 1]} : vector<2x8x16xf32> to vector<2x1x16xf32>
    %43 = vector.shape_cast %42 : vector<2x1x16xf32> to vector<2x16xf32>
    %44 = arith.truncf %43 : vector<2x16xf32> to vector<2x16xbf16>
    %c0_22 = arith.constant 0 : index
    %c48 = arith.constant 48 : index
    %45 = vector.load %arg16[%c0_22, %c48] : memref<2x128xbf16, #tpu.memory_space<vmem>>, vector<2x16xbf16>
    tpu.vector_store %arg16[%c0_22, %c48], %44 {strides = array<i32>} : memref<2x128xbf16, #tpu.memory_space<vmem>>, vector<2x16xbf16>,
    %46 = vector.extract_strided_slice %29 {offsets = [0, 4, 0], sizes = [2, 1, 16], strides = [1, 1, 1]} : vector<2x8x16xf32> to vector<2x1x16xf32>
    %47 = vector.shape_cast %46 : vector<2x1x16xf32> to vector<2x16xf32>
    %48 = arith.truncf %47 : vector<2x16xf32> to vector<2x16xbf16>
    %c0_23 = arith.constant 0 : index
    %c64 = arith.constant 64 : index
    %49 = vector.load %arg16[%c0_23, %c64] : memref<2x128xbf16, #tpu.memory_space<vmem>>, vector<2x16xbf16>
    tpu.vector_store %arg16[%c0_23, %c64], %48 {strides = array<i32>} : memref<2x128xbf16, #tpu.memory_space<vmem>>, vector<2x16xbf16>,
    %50 = vector.extract_strided_slice %29 {offsets = [0, 5, 0], sizes = [2, 1, 16], strides = [1, 1, 1]} : vector<2x8x16xf32> to vector<2x1x16xf32>
    %51 = vector.shape_cast %50 : vector<2x1x16xf32> to vector<2x16xf32>
    %52 = arith.truncf %51 : vector<2x16xf32> to vector<2x16xbf16>
    %c0_24 = arith.constant 0 : index
    %c80 = arith.constant 80 : index
    %53 = vector.load %arg16[%c0_24, %c80] : memref<2x128xbf16, #tpu.memory_space<vmem>>, vector<2x16xbf16>
    tpu.vector_store %arg16[%c0_24, %c80], %52 {strides = array<i32>} : memref<2x128xbf16, #tpu.memory_space<vmem>>, vector<2x16xbf16>,
    %54 = vector.extract_strided_slice %29 {offsets = [0, 6, 0], sizes = [2, 1, 16], strides = [1, 1, 1]} : vector<2x8x16xf32> to vector<2x1x16xf32>
    %55 = vector.shape_cast %54 : vector<2x1x16xf32> to vector<2x16xf32>
    %56 = arith.truncf %55 : vector<2x16xf32> to vector<2x16xbf16>
    %c0_25 = arith.constant 0 : index
    %c96 = arith.constant 96 : index
    %57 = vector.load %arg16[%c0_25, %c96] : memref<2x128xbf16, #tpu.memory_space<vmem>>, vector<2x16xbf16>
    tpu.vector_store %arg16[%c0_25, %c96], %56 {strides = array<i32>} : memref<2x128xbf16, #tpu.memory_space<vmem>>, vector<2x16xbf16>,
    %58 = vector.extract_strided_slice %29 {offsets = [0, 7, 0], sizes = [2, 1, 16], strides = [1, 1, 1]} : vector<2x8x16xf32> to vector<2x1x16xf32>
    %59 = vector.shape_cast %58 : vector<2x1x16xf32> to vector<2x16xf32>
    %60 = arith.truncf %59 : vector<2x16xf32> to vector<2x16xbf16>
    %c0_26 = arith.constant 0 : index
    %c112 = arith.constant 112 : index
    %61 = vector.load %arg16[%c0_26, %c112] : memref<2x128xbf16, #tpu.memory_space<vmem>>, vector<2x16xbf16>
    tpu.vector_store %arg16[%c0_26, %c112], %60 {strides = array<i32>} : memref<2x128xbf16, #tpu.memory_space<vmem>>, vector<2x16xbf16>,
    %c0_27 = arith.constant 0 : index
    %c0_28 = arith.constant 0 : index
    %62 = vector.load %arg16[%c0_27, %c0_28] : memref<2x128xbf16, #tpu.memory_space<vmem>>, vector<2x128xbf16>
    %c0_29 = arith.constant 0 : index
    %c0_30 = arith.constant 0 : index
    %63 = vector.load %arg10[%c0_29, %c0_30] : memref<1x1024xf32, #tpu.memory_space<vmem>>, vector<1x1024xf32>
    %c0_31 = arith.constant 0 : index
    %c0_32 = arith.constant 0 : index
    %64 = vector.load %arg3[%c0_31, %c0_32] : memref<2x1xf32, #tpu.memory_space<vmem>>, vector<2x1xf32>
    %c0_33 = arith.constant 0 : index
    %c0_34 = arith.constant 0 : index
    %65 = vector.load %arg9[%c0_33, %c0_34] : memref<1x1024xf32, #tpu.memory_space<vmem>>, vector<1x1024xf32>
    %66 = vector.broadcast %64 : vector<2x1xf32> to vector<2x1024xf32>
    %67 = vector.broadcast %65 : vector<1x1024xf32> to vector<2x1024xf32>
    %68 = arith.mulf %66, %67 : vector<2x1024xf32>
    %69 = vector.broadcast %63 : vector<1x1024xf32> to vector<2x1024xf32>
    %70 = arith.addf %69, %68 : vector<2x1024xf32>
    %c0_35 = arith.constant 0 : index
    %c0_36 = arith.constant 0 : index
    %71 = vector.load %arg8[%c0_35, %c0_36] : memref<128x1024xbf16, #tpu.memory_space<vmem>>, vector<128x1024xbf16>
    %cst_37 = arith.constant dense<0.000000e+00> : vector<2x1024xf32>
    %72 = tpu.matmul %62, %71, %cst_37 {dimension_numbers = #tpu.dot_dimension_numbers<[1], [0], [0], [1], [0, 0, 1, 1], [], []>} : vector<2x128xbf16>, vector<128x1024xbf16>, vector<2x1024xf32> -> vector<2x1024xf32>
    %73 = arith.addf %70, %72 : vector<2x1024xf32>
    %cst_38 = arith.constant 0.000000e+00 : f32
    %74 = vector.broadcast %cst_38 : f32 to vector<2x1024xf32>
    %75 = arith.maximumf %73, %74 : vector<2x1024xf32>
    %76 = arith.truncf %75 : vector<2x1024xf32> to vector<2x1024xbf16>
    %c0_39 = arith.constant 0 : index
    %c0_40 = arith.constant 0 : index
    %77 = vector.load %arg11[%c0_39, %c0_40] : memref<1024x128xbf16, #tpu.memory_space<vmem>>, vector<1024x128xbf16>
    %cst_41 = arith.constant dense<0.000000e+00> : vector<2x128xf32>
    %78 = tpu.matmul %76, %77, %cst_41 {dimension_numbers = #tpu.dot_dimension_numbers<[1], [0], [0], [1], [0, 0, 1, 1], [], []>} : vector<2x1024xbf16>, vector<1024x128xbf16>, vector<2x128xf32> -> vector<2x128xf32>
    %c0_42 = arith.constant 0 : index
    %c0_43 = arith.constant 0 : index
    %79 = vector.load %arg12[%c0_42, %c0_43] : memref<1x128xf32, #tpu.memory_space<vmem>>, vector<1x128xf32>
    %80 = vector.broadcast %79 : vector<1x128xf32> to vector<2x128xf32>
    %81 = arith.addf %78, %80 : vector<2x128xf32>
    %cst_44 = arith.constant 0.000000e+00 : f32
    %82 = vector.broadcast %cst_44 : f32 to vector<2x128xf32>
    %83 = arith.maximumf %81, %82 : vector<2x128xf32>
    %c0_45 = arith.constant 0 : index
    %c0_46 = arith.constant 0 : index
    %84 = vector.load %arg13[%c0_45, %c0_46] : memref<1x128xf32, #tpu.memory_space<vmem>>, vector<1x128xf32>
    %85 = vector.broadcast %84 : vector<1x128xf32> to vector<2x128xf32>
    %86 = arith.mulf %83, %85 : vector<2x128xf32>
    %cst_47 = arith.constant dense<0.000000e+00> : vector<2xf32>
    %87 = vector.multi_reduction <add>, %86, %cst_47 [1] : vector<2x128xf32> to vector<2xf32>
    %88 = vector.shape_cast %87 : vector<2xf32> to vector<2x1xf32>
    %c0_48 = arith.constant 0 : index
    %c0_49 = arith.constant 0 : index
    %89 = vector.load %arg14[%c0_48, %c0_49] : memref<1x1xf32, #tpu.memory_space<vmem>>, vector<1x1xf32>
    %90 = vector.broadcast %89 : vector<1x1xf32> to vector<2x1xf32>
    %91 = arith.addf %88, %90 : vector<2x1xf32>
    %c0_50 = arith.constant 0 : index
    %c0_51 = arith.constant 0 : index
    %92 = vector.load %arg15[%c0_50, %c0_51] : memref<2x1xf32, #tpu.memory_space<vmem>>, vector<2x1xf32>
    tpu.vector_store %arg15[%c0_50, %c0_51], %91 {strides = array<i32>} : memref<2x1xf32, #tpu.memory_space<vmem>>, vector<2x1xf32>,
    return
  }
  func.func @transform_0(%arg0: i32) -> (i32, i32, i32) {
    %c0_i32 = arith.constant 0 : i32
    %c0_i32_0 = arith.constant 0 : i32
    %c0_i32_1 = arith.constant 0 : i32
    return %arg0, %c0_i32, %c0_i32_0 : i32, i32, i32
  }
  func.func @transform_1(%arg0: i32) -> (i32, i32, i32) {
    %c0_i32 = arith.constant 0 : i32
    %c0_i32_0 = arith.constant 0 : i32
    %c0_i32_1 = arith.constant 0 : i32
    return %arg0, %c0_i32, %c0_i32_0 : i32, i32, i32
  }
  func.func @transform_2(%arg0: i32) -> (i32, i32) {
    %c0_i32 = arith.constant 0 : i32
    %c0_i32_0 = arith.constant 0 : i32
    return %arg0, %c0_i32 : i32, i32
  }
  func.func @transform_3(%arg0: i32) -> (i32, i32) {
    %c0_i32 = arith.constant 0 : i32
    %c0_i32_0 = arith.constant 0 : i32
    %c0_i32_1 = arith.constant 0 : i32
    return %c0_i32, %c0_i32_0 : i32, i32
  }
  func.func @transform_4(%arg0: i32) -> (i32, i32) {
    %c0_i32 = arith.constant 0 : i32
    %c0_i32_0 = arith.constant 0 : i32
    %c0_i32_1 = arith.constant 0 : i32
    return %c0_i32, %c0_i32_0 : i32, i32
  }
  func.func @transform_5(%arg0: i32) -> (i32, i32) {
    %c0_i32 = arith.constant 0 : i32
    %c0_i32_0 = arith.constant 0 : i32
    %c0_i32_1 = arith.constant 0 : i32
    return %c0_i32, %c0_i32_0 : i32, i32
  }
  func.func @transform_6(%arg0: i32) -> (i32, i32) {
    %c0_i32 = arith.constant 0 : i32
    %c0_i32_0 = arith.constant 0 : i32
    %c0_i32_1 = arith.constant 0 : i32
    return %c0_i32, %c0_i32_0 : i32, i32
  }
  func.func @transform_7(%arg0: i32) -> (i32, i32) {
    %c0_i32 = arith.constant 0 : i32
    %c0_i32_0 = arith.constant 0 : i32
    %c0_i32_1 = arith.constant 0 : i32
    return %c0_i32, %c0_i32_0 : i32, i32
  }
  func.func @transform_8(%arg0: i32) -> (i32, i32) {
    %c0_i32 = arith.constant 0 : i32
    %c0_i32_0 = arith.constant 0 : i32
    %c0_i32_1 = arith.constant 0 : i32
    return %c0_i32, %c0_i32_0 : i32, i32
  }
  func.func @transform_9(%arg0: i32) -> (i32, i32) {
    %c0_i32 = arith.constant 0 : i32
    %c0_i32_0 = arith.constant 0 : i32
    %c0_i32_1 = arith.constant 0 : i32
    return %c0_i32, %c0_i32_0 : i32, i32
  }
  func.func @transform_10(%arg0: i32) -> (i32, i32) {
    %c0_i32 = arith.constant 0 : i32
    %c0_i32_0 = arith.constant 0 : i32
    %c0_i32_1 = arith.constant 0 : i32
    return %c0_i32, %c0_i32_0 : i32, i32
  }
  func.func @transform_11(%arg0: i32) -> (i32, i32) {
    %c0_i32 = arith.constant 0 : i32
    %c0_i32_0 = arith.constant 0 : i32
    %c0_i32_1 = arith.constant 0 : i32
    return %c0_i32, %c0_i32_0 : i32, i32
  }
  func.func @transform_12(%arg0: i32) -> (i32, i32) {
    %c0_i32 = arith.constant 0 : i32
    %c0_i32_0 = arith.constant 0 : i32
    %c0_i32_1 = arith.constant 0 : i32
    return %c0_i32, %c0_i32_0 : i32, i32
  }
  func.func @transform_13(%arg0: i32) -> (i32, i32) {
    %c0_i32 = arith.constant 0 : i32
    %c0_i32_0 = arith.constant 0 : i32
    %c0_i32_1 = arith.constant 0 : i32
    return %c0_i32, %c0_i32_0 : i32, i32
  }
  func.func @transform_14(%arg0: i32) -> (i32, i32) {
    %c0_i32 = arith.constant 0 : i32
    %c0_i32_0 = arith.constant 0 : i32
    return %arg0, %c0_i32 : i32, i32
  }
}

</mosaic_0001>

<llo_original>
// kernel: graph_model_forward.1
$region0: #{graph_model_forward.1}
  #allocation0 [shape = 'u32[]', space=smem, size = 0x4, offset = 0x4, fixed_abs, tag = 'smem constant byte address 0x4 - core index']
  #allocation1 [shape = 'u32[72,128]{1,0:T(1,128)}', space=vmem, size = 0x9000, scoped, tag = 'internal scratch']
  #allocation2 [shape = 'bf16[2,128]{1,0:T(2,128)(2,1)}', space=vmem, size = 0x200, scoped, tag = 'scratch operand']
  #allocation3 [shape = 'f32[1,1]{1,0:T(1,128)S(1)}', space=vmem, size = 0x200, scoped, tag = 'scoped memory for graph_model_forward.1']
  %s0 = inlined_call_operand.vmem [shape: f32[2,8,8], index: 0, kind: input, shape index: {}]
  %s1 = inlined_call_operand.vmem [shape: f32[2,8,16], index: 1, kind: input, shape index: {}]
  %s2 = inlined_call_operand.vmem [shape: f32[2,1], index: 2, kind: input, shape index: {}]
  %s3 = inlined_call_operand.vmem [shape: f32[16,32], index: 3, kind: input, shape index: {}]
  %s4 = inlined_call_operand.vmem [shape: f32[1,32], index: 4, kind: input, shape index: {}]
  %s5 = inlined_call_operand.vmem [shape: f32[32,16], index: 5, kind: input, shape index: {}]
  %s6 = inlined_call_operand.vmem [shape: f32[1,16], index: 6, kind: input, shape index: {}]
  %s7 = inlined_call_operand.vmem [shape: bf16[128,1024], index: 7, kind: input, shape index: {}]
  %s8 = inlined_call_operand.vmem [shape: f32[1,1024], index: 8, kind: input, shape index: {}]
  %s9 = inlined_call_operand.vmem [shape: f32[1,1024], index: 9, kind: input, shape index: {}]
  %s10 = inlined_call_operand.vmem [shape: bf16[1024,128], index: 10, kind: input, shape index: {}]
  %s11 = inlined_call_operand.vmem [shape: f32[1,128], index: 11, kind: input, shape index: {}]
  %s12 = inlined_call_operand.vmem [shape: f32[1,128], index: 12, kind: input, shape index: {}]
  %s13 = inlined_call_operand.<no memory space> [shape: f32[1,1], index: 13, kind: input, shape index: {}]
  %s14 = inlined_call_operand.vmem [shape: f32[2,1], index: 14, kind: output, shape index: {}]
  %s15 = sld [smem:[#allocation0]]
  $region66: #{graph_model_forward.1} parent=0
    _
  %s17 = ssub.s32 1, %s15
  %s18 = scalar_select 0, %s17, %s15
  %v19 = vstv %s13
  %20 = vst [vmem:[#allocation3] sm:$0x1] %v19
  // Predicated region
  $region2: #{graph_model_forward.1} parent=0 // pred_check
    _
  $region3: #{graph_model_forward.1} parent=0 // pred_check_branch
    %22 = sbr.rel (0) target = $region5
  $region4: #{graph_model_forward.1} parent=0 // pred_region
    _
  $region5: #{graph_model_forward.1} parent=0 // pred_fallthru
    _
  // Predicated region
  $region6: #{graph_model_forward.1} parent=0 // pred_check
    _
  $region7: #{graph_model_forward.1} parent=0 // pred_check_branch
    %24 = sbr.rel (0) target = $region9
  $region8: #{graph_model_forward.1} parent=0 // pred_region
    _
  $region9: #{graph_model_forward.1} parent=0 // pred_fallthru
    _
  // Predicated region
  $region10: #{graph_model_forward.1} parent=0 // pred_check
    _
  $region11: #{graph_model_forward.1} parent=0 // pred_check_branch
    %26 = sbr.rel (0) target = $region13
  $region12: #{graph_model_forward.1} parent=0 // pred_region
    _
  $region13: #{graph_model_forward.1} parent=0 // pred_fallthru
    _
  // Predicated region
  $region14: #{graph_model_forward.1} parent=0 // pred_check
    _
  $region15: #{graph_model_forward.1} parent=0 // pred_check_branch
    %28 = sbr.rel (0) target = $region17
  $region16: #{graph_model_forward.1} parent=0 // pred_region
    _
  $region17: #{graph_model_forward.1} parent=0 // pred_fallthru
    _
  // Predicated region
  $region18: #{graph_model_forward.1} parent=0 // pred_check
    _
  $region19: #{graph_model_forward.1} parent=0 // pred_check_branch
    %30 = sbr.rel (0) target = $region21
  $region20: #{graph_model_forward.1} parent=0 // pred_region
    _
  $region21: #{graph_model_forward.1} parent=0 // pred_fallthru
    _
  // Predicated region
  $region22: #{graph_model_forward.1} parent=0 // pred_check
    _
  $region23: #{graph_model_forward.1} parent=0 // pred_check_branch
    %32 = sbr.rel (0) target = $region25
  $region24: #{graph_model_forward.1} parent=0 // pred_region
    _
  $region25: #{graph_model_forward.1} parent=0 // pred_fallthru
    _
  // Predicated region
  $region26: #{graph_model_forward.1} parent=0 // pred_check
    _
  $region27: #{graph_model_forward.1} parent=0 // pred_check_branch
    %34 = sbr.rel (0) target = $region29
  $region28: #{graph_model_forward.1} parent=0 // pred_region
    _
  $region29: #{graph_model_forward.1} parent=0 // pred_fallthru
    _
  // Predicated region
  $region30: #{graph_model_forward.1} parent=0 // pred_check
    _
  $region31: #{graph_model_forward.1} parent=0 // pred_check_branch
    %36 = sbr.rel (0) target = $region33
  $region32: #{graph_model_forward.1} parent=0 // pred_region
    _
  $region33: #{graph_model_forward.1} parent=0 // pred_fallthru
    _
  // Predicated region
  $region34: #{graph_model_forward.1} parent=0 // pred_check
    _
  $region35: #{graph_model_forward.1} parent=0 // pred_check_branch
    %38 = sbr.rel (0) target = $region37
  $region36: #{graph_model_forward.1} parent=0 // pred_region
    _
  $region37: #{graph_model_forward.1} parent=0 // pred_fallthru
    _
  // Predicated region
  $region38: #{graph_model_forward.1} parent=0 // pred_check
    _
  $region39: #{graph_model_forward.1} parent=0 // pred_check_branch
    %40 = sbr.rel (0) target = $region41
  $region40: #{graph_model_forward.1} parent=0 // pred_region
    _
  $region41: #{graph_model_forward.1} parent=0 // pred_fallthru
    _
  // Predicated region
  $region42: #{graph_model_forward.1} parent=0 // pred_check
    _
  $region43: #{graph_model_forward.1} parent=0 // pred_check_branch
    %42 = sbr.rel (0) target = $region45
  $region44: #{graph_model_forward.1} parent=0 // pred_region
    _
  $region45: #{graph_model_forward.1} parent=0 // pred_fallthru
    _
  // Predicated region
  $region46: #{graph_model_forward.1} parent=0 // pred_check
    _
  $region47: #{graph_model_forward.1} parent=0 // pred_check_branch
    %44 = sbr.rel (0) target = $region49
  $region48: #{graph_model_forward.1} parent=0 // pred_region
    _
  $region49: #{graph_model_forward.1} parent=0 // pred_fallthru
    _
  // Predicated region
  $region50: #{graph_model_forward.1} parent=0 // pred_check
    _
  $region51: #{graph_model_forward.1} parent=0 // pred_check_branch
    %46 = sbr.rel (0) target = $region53
  $region52: #{graph_model_forward.1} parent=0 // pred_region
    _
  $region53: #{graph_model_forward.1} parent=0 // pred_fallthru
    _
  // Predicated region
  $region54: #{graph_model_forward.1} parent=0 // pred_check
    _
  $region55: #{graph_model_forward.1} parent=0 // pred_check_branch
    %48 = sbr.rel (0) target = $region57
  $region56: #{graph_model_forward.1} parent=0 // pred_region
    _
  $region57: #{graph_model_forward.1} parent=0 // pred_fallthru
    _
  %v49 = vld [vmem:[%s0] sm:$0xff]
  %v50 = vld [vmem:[%s0 + $0x8] sm:$0xff]
  %v51 = vld [vmem:[%s1] sm:$0xff]
  %v52 = vld [vmem:[%s1 + $0x8] sm:$0xff]
  %v53 = vld [vmem:[%s3] sm:$0xff]
  %v54 = vld [vmem:[%s3 + $0x8] sm:$0xff]
  %vm55 = vcmask 130048
  %v57 = vsel %vm55, %v51, 0
  %v60 = vsel %vm55, %v52, 0
  %62 = vmatpush.msra.mxu0 0.0
  %63 = vmatpush.msra.mxu0 0.0
  %64 = vmatpush.msra.mxu0 0.0
  %65 = vmatpush.msra.mxu0 0.0
  %66 = vmatpush.msra.mxu0 0.0
  %67 = vmatpush.msra.mxu0 0.0
  %68 = vmatpush.msra.mxu0 0.0
  %69 = vmatpush.msra.mxu0 0.0
  %70 = vmatpush.msra.mxu0 0.0
  %71 = vmatpush.msra.mxu0 0.0
  %72 = vmatpush.msra.mxu0 0.0
  %73 = vmatpush.msra.mxu0 0.0
  %74 = vmatpush.msra.mxu0 0.0
  %75 = vmatpush.msra.mxu0 0.0
  %76 = vmatpush.msra.mxu0 %v54
  %77 = vmatpush.msra.mxu0 %v53
  %78 = vmatmul.f32.gmra.mxu0 %v57
  %v79 = vpop.f32.mrf.mxu0
  %v80 = vadd.f32 0.0, %v79
  %81 = vmatmul.f32.gmra.mxu0 %v60
  %v82 = vpop.f32.mrf.mxu0
  %v83 = vadd.f32 0.0, %v82
  %84 = vdwg.mxu0
  %v85 = vld [vmem:[%s4] sm:$0x1]
  %v87 = vperm.slane %v85, 0
  %vm89 = vcmask 64512
  %v91 = vsel %vm89, %v49, 0
  %93 = vmatpush.msra.mxu0 0.0
  %94 = vmatpush.msra.mxu0 0.0
  %95 = vmatpush.msra.mxu0 0.0
  %96 = vmatpush.msra.mxu0 0.0
  %97 = vmatpush.msra.mxu0 0.0
  %98 = vmatpush.msra.mxu0 0.0
  %99 = vmatpush.msra.mxu0 0.0
  %100 = vmatpush.msra.mxu0 0.0
  %101 = vmatpush.msra.mxu0 0.0
  %102 = vmatpush.msra.mxu0 0.0
  %103 = vmatpush.msra.mxu0 0.0
  %104 = vmatpush.msra.mxu0 0.0
  %105 = vmatpush.msra.mxu0 0.0
  %106 = vmatpush.msra.mxu0 0.0
  %107 = vmatpush.msra.mxu0 0.0
  %108 = vmatpush.msra.mxu0 %v80
  %109 = vmatmul.f32.gmra.mxu0 %v91
  %v110 = vpop.f32.mrf.mxu0
  %v111 = vadd.f32 %v87, %v110
  %112 = vdwg.mxu0
  %v114 = vsel %vm89, %v50, 0
  %116 = vmatpush.msra.mxu0 0.0
  %117 = vmatpush.msra.mxu0 0.0
  %118 = vmatpush.msra.mxu0 0.0
  %119 = vmatpush.msra.mxu0 0.0
  %120 = vmatpush.msra.mxu0 0.0
  %121 = vmatpush.msra.mxu0 0.0
  %122 = vmatpush.msra.mxu0 0.0
  %123 = vmatpush.msra.mxu0 0.0
  %124 = vmatpush.msra.mxu0 0.0
  %125 = vmatpush.msra.mxu0 0.0
  %126 = vmatpush.msra.mxu0 0.0
  %127 = vmatpush.msra.mxu0 0.0
  %128 = vmatpush.msra.mxu0 0.0
  %129 = vmatpush.msra.mxu0 0.0
  %130 = vmatpush.msra.mxu0 0.0
  %131 = vmatpush.msra.mxu0 %v83
  %132 = vmatmul.f32.gmra.mxu0 %v114
  %v133 = vpop.f32.mrf.mxu0
  %v134 = vadd.f32 %v87, %v133
  %135 = vdwg.mxu0
  %v136 = vxor.u32 %v111, 2147483648
  %v137 = vxor.u32 %v134, 2147483648
  %v138 = vmul.f32 %v136, 1.442695
  %v139 = vpow.pop %v138
  %v140 = vmul.f32 %v137, 1.442695
  %v141 = vpow.pop %v140
  %v142 = vadd.f32 %v139, 1.0
  %v143 = vadd.f32 %v141, 1.0
  %v144 = vrcp.pop %v142
  %v145 = vmul.f32 %v142, %v144
  %v146 = vsub.f32 1.0, %v145
  %v147 = vmul.f32 %v144, %v146
  %v148 = vadd.f32 %v144, %v147
  %vm149 = vweird.f32 %v142
  %vm150 = vweird.f32 %v144
  %vm151 = vmor %vm149, %vm150
  %v152 = vsel %vm151, %v144, %v148
  %v153 = vand.u32 2147483647, %v142
  %vm154 = vcmp.eq.f32.partialorder %v153, 8.507059e+37
  %v155 = vand.u32 %v142, 2147483648
  %v156 = vor.u32 1.1754944e-38, %v155
  %v157 = vsel %vm154, %v156, %v152
  %v158 = vmul.f32 1.0, %v157
  %v159 = vrcp.pop %v143
  %v160 = vmul.f32 %v143, %v159
  %v161 = vsub.f32 1.0, %v160
  %v162 = vmul.f32 %v159, %v161
  %v163 = vadd.f32 %v159, %v162
  %vm164 = vweird.f32 %v143
  %vm165 = vweird.f32 %v159
  %vm166 = vmor %vm164, %vm165
  %v167 = vsel %vm166, %v159, %v163
  %v168 = vand.u32 2147483647, %v143
  %vm169 = vcmp.eq.f32.partialorder %v168, 8.507059e+37
  %v170 = vand.u32 %v143, 2147483648
  %v171 = vor.u32 1.1754944e-38, %v170
  %v172 = vsel %vm169, %v171, %v167
  %v173 = vmul.f32 1.0, %v172
  %v174 = vld [vmem:[%s5] sm:$0xff]
  %v175 = vld [vmem:[%s5 + $0x8] sm:$0xff]
  %v176 = vld [vmem:[%s5 + $0x10] sm:$0xff]
  %v177 = vld [vmem:[%s5 + $0x18] sm:$0xff]
  %vm178 = vcmask 261120
  %v180 = vsel %vm178, %v158, 0
  %v183 = vsel %vm178, %v173, 0
  %185 = vmatpush.msra.mxu0 0.0
  %186 = vmatpush.msra.mxu0 0.0
  %187 = vmatpush.msra.mxu0 0.0
  %188 = vmatpush.msra.mxu0 0.0
  %189 = vmatpush.msra.mxu0 0.0
  %190 = vmatpush.msra.mxu0 0.0
  %191 = vmatpush.msra.mxu0 0.0
  %192 = vmatpush.msra.mxu0 0.0
  %193 = vmatpush.msra.mxu0 0.0
  %194 = vmatpush.msra.mxu0 0.0
  %195 = vmatpush.msra.mxu0 0.0
  %196 = vmatpush.msra.mxu0 0.0
  %197 = vmatpush.msra.mxu0 %v177
  %198 = vmatpush.msra.mxu0 %v176
  %199 = vmatpush.msra.mxu0 %v175
  %200 = vmatpush.msra.mxu0 %v174
  %201 = vmatmul.f32.gmra.mxu0 %v180
  %v202 = vpop.f32.mrf.mxu0
  %v203 = vadd.f32 0.0, %v202
  %204 = vmatmul.f32.gmra.mxu0 %v183
  %v205 = vpop.f32.mrf.mxu0
  %v206 = vadd.f32 0.0, %v205
  %207 = vdwg.mxu0
  %v208 = vld [vmem:[%s6] sm:$0x1]
  %v210 = vperm.slane %v208, 0
  %212 = vmatpush.msra.mxu0 0.0
  %213 = vmatpush.msra.mxu0 0.0
  %214 = vmatpush.msra.mxu0 0.0
  %215 = vmatpush.msra.mxu0 0.0
  %216 = vmatpush.msra.mxu0 0.0
  %217 = vmatpush.msra.mxu0 0.0
  %218 = vmatpush.msra.mxu0 0.0
  %219 = vmatpush.msra.mxu0 0.0
  %220 = vmatpush.msra.mxu0 0.0
  %221 = vmatpush.msra.mxu0 0.0
  %222 = vmatpush.msra.mxu0 0.0
  %223 = vmatpush.msra.mxu0 0.0
  %224 = vmatpush.msra.mxu0 0.0
  %225 = vmatpush.msra.mxu0 0.0
  %226 = vmatpush.msra.mxu0 0.0
  %227 = vmatpush.msra.mxu0 %v203
  %228 = vmatmul.f32.gmra.mxu0 %v91
  %v229 = vpop.f32.mrf.mxu0
  %v230 = vadd.f32 %v210, %v229
  %231 = vdwg.mxu0
  %232 = vmatpush.msra.mxu0 0.0
  %233 = vmatpush.msra.mxu0 0.0
  %234 = vmatpush.msra.mxu0 0.0
  %235 = vmatpush.msra.mxu0 0.0
  %236 = vmatpush.msra.mxu0 0.0
  %237 = vmatpush.msra.mxu0 0.0
  %238 = vmatpush.msra.mxu0 0.0
  %239 = vmatpush.msra.mxu0 0.0
  %240 = vmatpush.msra.mxu0 0.0
  %241 = vmatpush.msra.mxu0 0.0
  %242 = vmatpush.msra.mxu0 0.0
  %243 = vmatpush.msra.mxu0 0.0
  %244 = vmatpush.msra.mxu0 0.0
  %245 = vmatpush.msra.mxu0 0.0
  %246 = vmatpush.msra.mxu0 0.0
  %247 = vmatpush.msra.mxu0 %v206
  %248 = vmatmul.f32.gmra.mxu0 %v114
  %v249 = vpop.f32.mrf.mxu0
  %v250 = vadd.f32 %v210, %v249
  %251 = vdwg.mxu0
  %v252 = vxor.u32 %v230, 2147483648
  %v253 = vxor.u32 %v250, 2147483648
  %v254 = vmul.f32 %v252, 1.442695
  %v255 = vpow.pop %v254
  %v256 = vmul.f32 %v253, 1.442695
  %v257 = vpow.pop %v256
  %v258 = vadd.f32 %v255, 1.0
  %v259 = vadd.f32 %v257, 1.0
  %v260 = vrcp.pop %v258
  %v261 = vmul.f32 %v258, %v260
  %v262 = vsub.f32 1.0, %v261
  %v263 = vmul.f32 %v260, %v262
  %v264 = vadd.f32 %v260, %v263
  %vm265 = vweird.f32 %v258
  %vm266 = vweird.f32 %v260
  %vm267 = vmor %vm265, %vm266
  %v268 = vsel %vm267, %v260, %v264
  %v269 = vand.u32 2147483647, %v258
  %vm270 = vcmp.eq.f32.partialorder %v269, 8.507059e+37
  %v271 = vand.u32 %v258, 2147483648
  %v272 = vor.u32 1.1754944e-38, %v271
  %v273 = vsel %vm270, %v272, %v268
  %v274 = vmul.f32 1.0, %v273
  %v275 = vrcp.pop %v259
  %v276 = vmul.f32 %v259, %v275
  %v277 = vsub.f32 1.0, %v276
  %v278 = vmul.f32 %v275, %v277
  %v279 = vadd.f32 %v275, %v278
  %vm280 = vweird.f32 %v259
  %vm281 = vweird.f32 %v275
  %vm282 = vmor %vm280, %vm281
  %v283 = vsel %vm282, %v275, %v279
  %v284 = vand.u32 2147483647, %v259
  %vm285 = vcmp.eq.f32.partialorder %v284, 8.507059e+37
  %v286 = vand.u32 %v259, 2147483648
  %v287 = vor.u32 1.1754944e-38, %v286
  %v288 = vsel %vm285, %v287, %v283
  %v289 = vmul.f32 1.0, %v288
  %v290 = vpack.c.bf16 %v274, %v274
  %v291 = vpack.c.bf16 %v289, %v289
  %v294 = vrot.slane %v290, 3
  %v295 = vrot.slane %v291, 3
  %vm296 = vcmask 1040384
  %v299 = vsel %vm296, %v290, %v294
  %v302 = vsel %vm296, %v291, %v295
  %303 = vst [vmem:[#allocation1] ss:$4 sm:$0xff] %v299
  %v304 = vld [vmem:[#allocation1] sm:$0xff]
  %s306 = scalar_lea.vmem [#allocation1], 32
  %307 = vst [vmem:[%s306] ss:$4 sm:$0xff] %v302
  %v308 = vld [vmem:[#allocation1 + $0x20] sm:$0xff]
  %v310 = vunpack.c.l.b16 %v304
  %v311 = vunpack.c.l.b16 %v308
  %v312 = vrot.slane %v311, 7
  %vm313 = vcmask 1041409
  %v314 = vsel %vm313, %v312, %v310
  %v315 = vpack.c.b16 %v314, %v314
  %v316 = vrot.slane %v315, 3
  %v319 = vsel %vm296, %v315, %v316
  %vm321 = vcmask 122880
  %322 = vst.msk [vmem:[#allocation2] sm:$0x1] %vm321, %v319
  %323 = vst [vmem:[#allocation1] ss:$4 sm:$0xff] %v299
  %v324 = vld [vmem:[#allocation1] sm:$0xff]
  %s326 = scalar_lea.vmem [#allocation1], 32
  %327 = vst [vmem:[%s326] ss:$4 sm:$0xff] %v302
  %v328 = vld [vmem:[#allocation1 + $0x20] sm:$0xff]
  %v330 = vunpack.c.l.b16 %v324
  %v331 = vunpack.c.l.b16 %v328
  %v332 = vrot.slane %v330, 1
  %v333 = vsel %vm313, %v331, %v332
  %v334 = vpack.c.b16 %v333, %v333
  %v335 = vrot.slane %v334, 3
  %v338 = vsel %vm296, %v334, %v335
  %340 = vrot.lane.b32.xlu0 %v338, 16
  %v341 = vpop.permute.xlu0 %340
  %vm343 = vcmask 254080
  %344 = vst.msk [vmem:[#allocation2] sm:$0x1] %vm343, %v341
  %345 = vst [vmem:[#allocation1] sm:$0xff] %v290
  %s346 = scalar_lea.vmem [#allocation1], 1
  %v347 = vld [vmem:[%s346] ss:$4 sm:$0xff]
  %348 = vst [vmem:[#allocation1 + $0x20] sm:$0xff] %v291
  %s349 = scalar_lea.vmem [#allocation1], 33
  %v350 = vld [vmem:[%s349] ss:$4 sm:$0xff]
  %351 = vst [vmem:[#allocation1] ss:$4 sm:$0xff] %v347
  %v352 = vld [vmem:[#allocation1] sm:$0xff]
  %s354 = scalar_lea.vmem [#allocation1], 32
  %355 = vst [vmem:[%s354] ss:$4 sm:$0xff] %v350
  %v356 = vld [vmem:[#allocation1 + $0x20] sm:$0xff]
  %v358 = vunpack.c.l.b16 %v352
  %v359 = vunpack.c.l.b16 %v356
  %v360 = vrot.slane %v359, 7
  %v361 = vsel %vm313, %v360, %v358
  %v362 = vpack.c.b16 %v361, %v361
  %v363 = vrot.slane %v362, 3
  %v366 = vsel %vm296, %v362, %v363
  %368 = vrot.lane.b32.xlu0 %v366, 32
  %v369 = vpop.permute.xlu0 %368
  %vm371 = vcmask 385280
  %372 = vst.msk [vmem:[#allocation2] sm:$0x1] %vm371, %v369
  %373 = vst [vmem:[#allocation1] sm:$0xff] %v290
  %s374 = scalar_lea.vmem [#allocation1], 1
  %v375 = vld [vmem:[%s374] ss:$4 sm:$0xff]
  %376 = vst [vmem:[#allocation1 + $0x20] sm:$0xff] %v291
  %s377 = scalar_lea.vmem [#allocation1], 33
  %v378 = vld [vmem:[%s377] ss:$4 sm:$0xff]
  %379 = vst [vmem:[#allocation1] ss:$4 sm:$0xff] %v375
  %v380 = vld [vmem:[#allocation1] sm:$0xff]
  %s382 = scalar_lea.vmem [#allocation1], 32
  %383 = vst [vmem:[%s382] ss:$4 sm:$0xff] %v378
  %v384 = vld [vmem:[#allocation1 + $0x20] sm:$0xff]
  %v386 = vunpack.c.l.b16 %v380
  %v387 = vunpack.c.l.b16 %v384
  %v388 = vrot.slane %v386, 1
  %v389 = vsel %vm313, %v387, %v388
  %v390 = vpack.c.b16 %v389, %v389
  %v391 = vrot.slane %v390, 3
  %v394 = vsel %vm296, %v390, %v391
  %396 = vrot.lane.b32.xlu0 %v394, 48
  %v397 = vpop.permute.xlu0 %396
  %vm399 = vcmask 516480
  %400 = vst.msk [vmem:[#allocation2] sm:$0x1] %vm399, %v397
  %401 = vst [vmem:[#allocation1] sm:$0xff] %v290
  %s402 = scalar_lea.vmem [#allocation1], 2
  %v403 = vld [vmem:[%s402] ss:$4 sm:$0xff]
  %404 = vst [vmem:[#allocation1 + $0x20] sm:$0xff] %v291
  %s405 = scalar_lea.vmem [#allocation1], 34
  %v406 = vld [vmem:[%s405] ss:$4 sm:$0xff]
  %407 = vst [vmem:[#allocation1] ss:$4 sm:$0xff] %v403
  %v408 = vld [vmem:[#allocation1] sm:$0xff]
  %s410 = scalar_lea.vmem [#allocation1], 32
  %411 = vst [vmem:[%s410] ss:$4 sm:$0xff] %v406
  %v412 = vld [vmem:[#allocation1 + $0x20] sm:$0xff]
  %v414 = vunpack.c.l.b16 %v408
  %v415 = vunpack.c.l.b16 %v412
  %v416 = vrot.slane %v415, 7
  %v417 = vsel %vm313, %v416, %v414
  %v418 = vpack.c.b16 %v417, %v417
  %v419 = vrot.slane %v418, 3
  %v422 = vsel %vm296, %v418, %v419
  %424 = vrot.lane.b32.xlu0 %v422, 64
  %v425 = vpop.permute.xlu0 %424
  %vm427 = vcmask 647680
  %428 = vst.msk [vmem:[#allocation2] sm:$0x1] %vm427, %v425
  %429 = vst [vmem:[#allocation1] sm:$0xff] %v290
  %s430 = scalar_lea.vmem [#allocation1], 2
  %v431 = vld [vmem:[%s430] ss:$4 sm:$0xff]
  %432 = vst [vmem:[#allocation1 + $0x20] sm:$0xff] %v291
  %s433 = scalar_lea.vmem [#allocation1], 34
  %v434 = vld [vmem:[%s433] ss:$4 sm:$0xff]
  %435 = vst [vmem:[#allocation1] ss:$4 sm:$0xff] %v431
  %v436 = vld [vmem:[#allocation1] sm:$0xff]
  %s438 = scalar_lea.vmem [#allocation1], 32
  %439 = vst [vmem:[%s438] ss:$4 sm:$0xff] %v434
  %v440 = vld [vmem:[#allocation1 + $0x20] sm:$0xff]
  %v442 = vunpack.c.l.b16 %v436
  %v443 = vunpack.c.l.b16 %v440
  %v444 = vrot.slane %v442, 1
  %v445 = vsel %vm313, %v443, %v444
  %v446 = vpack.c.b16 %v445, %v445
  %v447 = vrot.slane %v446, 3
  %v450 = vsel %vm296, %v446, %v447
  %452 = vrot.lane.b32.xlu0 %v450, 80
  %v453 = vpop.permute.xlu0 %452
  %vm455 = vcmask 778880
  %456 = vst.msk [vmem:[#allocation2] sm:$0x1] %vm455, %v453
  %457 = vst [vmem:[#allocation1] sm:$0xff] %v290
  %s458 = scalar_lea.vmem [#allocation1], 3
  %v459 = vld [vmem:[%s458] ss:$4 sm:$0xff]
  %460 = vst [vmem:[#allocation1 + $0x20] sm:$0xff] %v291
  %s461 = scalar_lea.vmem [#allocation1], 35
  %v462 = vld [vmem:[%s461] ss:$4 sm:$0xff]
  %463 = vst [vmem:[#allocation1] ss:$4 sm:$0xff] %v459
  %v464 = vld [vmem:[#allocation1] sm:$0xff]
  %s466 = scalar_lea.vmem [#allocation1], 32
  %467 = vst [vmem:[%s466] ss:$4 sm:$0xff] %v462
  %v468 = vld [vmem:[#allocation1 + $0x20] sm:$0xff]
  %v470 = vunpack.c.l.b16 %v464
  %v471 = vunpack.c.l.b16 %v468
  %v472 = vrot.slane %v471, 7
  %v473 = vsel %vm313, %v472, %v470
  %v474 = vpack.c.b16 %v473, %v473
  %v475 = vrot.slane %v474, 3
  %v478 = vsel %vm296, %v474, %v475
  %480 = vrot.lane.b32.xlu0 %v478, 96
  %v481 = vpop.permute.xlu0 %480
  %vm483 = vcmask 910080
  %484 = vst.msk [vmem:[#allocation2] sm:$0x1] %vm483, %v481
  %485 = vst [vmem:[#allocation1] sm:$0xff] %v290
  %s486 = scalar_lea.vmem [#allocation1], 3
  %v487 = vld [vmem:[%s486] ss:$4 sm:$0xff]
  %488 = vst [vmem:[#allocation1 + $0x20] sm:$0xff] %v291
  %s489 = scalar_lea.vmem [#allocation1], 35
  %v490 = vld [vmem:[%s489] ss:$4 sm:$0xff]
  %491 = vst [vmem:[#allocation1] ss:$4 sm:$0xff] %v487
  %v492 = vld [vmem:[#allocation1] sm:$0xff]
  %s494 = scalar_lea.vmem [#allocation1], 32
  %495 = vst [vmem:[%s494] ss:$4 sm:$0xff] %v490
  %v496 = vld [vmem:[#allocation1 + $0x20] sm:$0xff]
  %v498 = vunpack.c.l.b16 %v492
  %v499 = vunpack.c.l.b16 %v496
  %v500 = vrot.slane %v498, 1
  %v501 = vsel %vm313, %v499, %v500
  %v502 = vpack.c.b16 %v501, %v501
  %v503 = vrot.slane %v502, 3
  %v506 = vsel %vm296, %v502, %v503
  %508 = vrot.lane.b32.xlu0 %v506, 112
  %v509 = vpop.permute.xlu0 %508
  %vm511 = vcmask 1041280
  %512 = vst.msk [vmem:[#allocation2] sm:$0x1] %vm511, %v509
  %v513 = vld [vmem:[#allocation2] sm:$0x1]
  %v514 = vld [vmem:[%s9] sm:$0xff]
  %v515 = vld [vmem:[%s2] sm:$0x3]
  %v516 = vld [vmem:[%s8] sm:$0xff]
  %518 = vset.pattern.permute.xlu0 0
  %519 = vperm.xlu0 %518, %v515
  %v520 = vpop.permute.xlu0 %519
  %v523 = vperm.slane %v516, 0
  %v524 = vperm.slane %v516, 1
  %v525 = vperm.slane %v516, 2
  %v526 = vperm.slane %v516, 3
  %v527 = vperm.slane %v516, 4
  %v528 = vperm.slane %v516, 5
  %v529 = vperm.slane %v516, 6
  %v530 = vperm.slane %v516, 7
  %v539 = vmul.f32 %v520, %v523
  %v540 = vmul.f32 %v520, %v524
  %v541 = vmul.f32 %v520, %v525
  %v542 = vmul.f32 %v520, %v526
  %v543 = vmul.f32 %v520, %v527
  %v544 = vmul.f32 %v520, %v528
  %v545 = vmul.f32 %v520, %v529
  %v546 = vmul.f32 %v520, %v530
  %v548 = vperm.slane %v514, 0
  %v549 = vperm.slane %v514, 1
  %v550 = vperm.slane %v514, 2
  %v551 = vperm.slane %v514, 3
  %v552 = vperm.slane %v514, 4
  %v553 = vperm.slane %v514, 5
  %v554 = vperm.slane %v514, 6
  %v555 = vperm.slane %v514, 7
  %v564 = vadd.f32 %v548, %v539
  %v565 = vadd.f32 %v549, %v540
  %v566 = vadd.f32 %v550, %v541
  %v567 = vadd.f32 %v551, %v542
  %v568 = vadd.f32 %v552, %v543
  %v569 = vadd.f32 %v553, %v544
  %v570 = vadd.f32 %v554, %v545
  %v571 = vadd.f32 %v555, %v546
  %v572 = vld [vmem:[%s7] sm:$0xff]
  %v573 = vld [vmem:[%s7 + $0x8] sm:$0xff]
  %v574 = vld [vmem:[%s7 + $0x10] sm:$0xff]
  %v575 = vld [vmem:[%s7 + $0x18] sm:$0xff]
  %v576 = vld [vmem:[%s7 + $0x20] sm:$0xff]
  %v577 = vld [vmem:[%s7 + $0x28] sm:$0xff]
  %v578 = vld [vmem:[%s7 + $0x30] sm:$0xff]
  %v579 = vld [vmem:[%s7 + $0x38] sm:$0xff]
  %v580 = vld [vmem:[%s7 + $0x40] sm:$0xff]
  %v581 = vld [vmem:[%s7 + $0x48] sm:$0xff]
  %v582 = vld [vmem:[%s7 + $0x50] sm:$0xff]
  %v583 = vld [vmem:[%s7 + $0x58] sm:$0xff]
  %v584 = vld [vmem:[%s7 + $0x60] sm:$0xff]
  %v585 = vld [vmem:[%s7 + $0x68] sm:$0xff]
  %v586 = vld [vmem:[%s7 + $0x70] sm:$0xff]
  %v587 = vld [vmem:[%s7 + $0x78] sm:$0xff]
  %v588 = vld [vmem:[%s7 + $0x80] sm:$0xff]
  %v589 = vld [vmem:[%s7 + $0x88] sm:$0xff]
  %v590 = vld [vmem:[%s7 + $0x90] sm:$0xff]
  %v591 = vld [vmem:[%s7 + $0x98] sm:$0xff]
  %v592 = vld [vmem:[%s7 + $0xa0] sm:$0xff]
  %v593 = vld [vmem:[%s7 + $0xa8] sm:$0xff]
  %v594 = vld [vmem:[%s7 + $0xb0] sm:$0xff]
  %v595 = vld [vmem:[%s7 + $0xb8] sm:$0xff]
  %v596 = vld [vmem:[%s7 + $0xc0] sm:$0xff]
  %v597 = vld [vmem:[%s7 + $0xc8] sm:$0xff]
  %v598 = vld [vmem:[%s7 + $0xd0] sm:$0xff]
  %v599 = vld [vmem:[%s7 + $0xd8] sm:$0xff]
  %v600 = vld [vmem:[%s7 + $0xe0] sm:$0xff]
  %v601 = vld [vmem:[%s7 + $0xe8] sm:$0xff]
  %v602 = vld [vmem:[%s7 + $0xf0] sm:$0xff]
  %v603 = vld [vmem:[%s7 + $0xf8] sm:$0xff]
  %v604 = vld [vmem:[%s7 + $0x100] sm:$0xff]
  %v605 = vld [vmem:[%s7 + $0x108] sm:$0xff]
  %v606 = vld [vmem:[%s7 + $0x110] sm:$0xff]
  %v607 = vld [vmem:[%s7 + $0x118] sm:$0xff]
  %v608 = vld [vmem:[%s7 + $0x120] sm:$0xff]
  %v609 = vld [vmem:[%s7 + $0x128] sm:$0xff]
  %v610 = vld [vmem:[%s7 + $0x130] sm:$0xff]
  %v611 = vld [vmem:[%s7 + $0x138] sm:$0xff]
  %v612 = vld [vmem:[%s7 + $0x140] sm:$0xff]
  %v613 = vld [vmem:[%s7 + $0x148] sm:$0xff]
  %v614 = vld [vmem:[%s7 + $0x150] sm:$0xff]
  %v615 = vld [vmem:[%s7 + $0x158] sm:$0xff]
  %v616 = vld [vmem:[%s7 + $0x160] sm:$0xff]
  %v617 = vld [vmem:[%s7 + $0x168] sm:$0xff]
  %v618 = vld [vmem:[%s7 + $0x170] sm:$0xff]
  %v619 = vld [vmem:[%s7 + $0x178] sm:$0xff]
  %v620 = vld [vmem:[%s7 + $0x180] sm:$0xff]
  %v621 = vld [vmem:[%s7 + $0x188] sm:$0xff]
  %v622 = vld [vmem:[%s7 + $0x190] sm:$0xff]
  %v623 = vld [vmem:[%s7 + $0x198] sm:$0xff]
  %v624 = vld [vmem:[%s7 + $0x1a0] sm:$0xff]
  %v625 = vld [vmem:[%s7 + $0x1a8] sm:$0xff]
  %v626 = vld [vmem:[%s7 + $0x1b0] sm:$0xff]
  %v627 = vld [vmem:[%s7 + $0x1b8] sm:$0xff]
  %v628 = vld [vmem:[%s7 + $0x1c0] sm:$0xff]
  %v629 = vld [vmem:[%s7 + $0x1c8] sm:$0xff]
  %v630 = vld [vmem:[%s7 + $0x1d0] sm:$0xff]
  %v631 = vld [vmem:[%s7 + $0x1d8] sm:$0xff]
  %v632 = vld [vmem:[%s7 + $0x1e0] sm:$0xff]
  %v633 = vld [vmem:[%s7 + $0x1e8] sm:$0xff]
  %v634 = vld [vmem:[%s7 + $0x1f0] sm:$0xff]
  %v635 = vld [vmem:[%s7 + $0x1f8] sm:$0xff]
  %v700 = vunpack.c.l.b16 %v572
  %v701 = vunpack.c.h.b16 %v572
  %v702 = vunpack.c.l.b16 %v573
  %v703 = vunpack.c.h.b16 %v573
  %v704 = vunpack.c.l.b16 %v574
  %v705 = vunpack.c.h.b16 %v574
  %v706 = vunpack.c.l.b16 %v575
  %v707 = vunpack.c.h.b16 %v575
  %v708 = vunpack.c.l.b16 %v576
  %v709 = vunpack.c.h.b16 %v576
  %v710 = vunpack.c.l.b16 %v577
  %v711 = vunpack.c.h.b16 %v577
  %v712 = vunpack.c.l.b16 %v578
  %v713 = vunpack.c.h.b16 %v578
  %v714 = vunpack.c.l.b16 %v579
  %v715 = vunpack.c.h.b16 %v579
  %v716 = vunpack.c.l.b16 %v580
  %v717 = vunpack.c.h.b16 %v580
  %v718 = vunpack.c.l.b16 %v581
  %v719 = vunpack.c.h.b16 %v581
  %v720 = vunpack.c.l.b16 %v582
  %v721 = vunpack.c.h.b16 %v582
  %v722 = vunpack.c.l.b16 %v583
  %v723 = vunpack.c.h.b16 %v583
  %v724 = vunpack.c.l.b16 %v584
  %v725 = vunpack.c.h.b16 %v584
  %v726 = vunpack.c.l.b16 %v585
  %v727 = vunpack.c.h.b16 %v585
  %v728 = vunpack.c.l.b16 %v586
  %v729 = vunpack.c.h.b16 %v586
  %v730 = vunpack.c.l.b16 %v587
  %v731 = vunpack.c.h.b16 %v587
  %v732 = vunpack.c.l.b16 %v588
  %v733 = vunpack.c.h.b16 %v588
  %v734 = vunpack.c.l.b16 %v589
  %v735 = vunpack.c.h.b16 %v589
  %v736 = vunpack.c.l.b16 %v590
  %v737 = vunpack.c.h.b16 %v590
  %v738 = vunpack.c.l.b16 %v591
  %v739 = vunpack.c.h.b16 %v591
  %v740 = vunpack.c.l.b16 %v592
  %v741 = vunpack.c.h.b16 %v592
  %v742 = vunpack.c.l.b16 %v593
  %v743 = vunpack.c.h.b16 %v593
  %v744 = vunpack.c.l.b16 %v594
  %v745 = vunpack.c.h.b16 %v594
  %v746 = vunpack.c.l.b16 %v595
  %v747 = vunpack.c.h.b16 %v595
  %v748 = vunpack.c.l.b16 %v596
  %v749 = vunpack.c.h.b16 %v596
  %v750 = vunpack.c.l.b16 %v597
  %v751 = vunpack.c.h.b16 %v597
  %v752 = vunpack.c.l.b16 %v598
  %v753 = vunpack.c.h.b16 %v598
  %v754 = vunpack.c.l.b16 %v599
  %v755 = vunpack.c.h.b16 %v599
  %v756 = vunpack.c.l.b16 %v600
  %v757 = vunpack.c.h.b16 %v600
  %v758 = vunpack.c.l.b16 %v601
  %v759 = vunpack.c.h.b16 %v601
  %v760 = vunpack.c.l.b16 %v602
  %v761 = vunpack.c.h.b16 %v602
  %v762 = vunpack.c.l.b16 %v603
  %v763 = vunpack.c.h.b16 %v603
  %v764 = vunpack.c.l.b16 %v604
  %v765 = vunpack.c.h.b16 %v604
  %v766 = vunpack.c.l.b16 %v605
  %v767 = vunpack.c.h.b16 %v605
  %v768 = vunpack.c.l.b16 %v606
  %v769 = vunpack.c.h.b16 %v606
  %v770 = vunpack.c.l.b16 %v607
  %v771 = vunpack.c.h.b16 %v607
  %v772 = vunpack.c.l.b16 %v608
  %v773 = vunpack.c.h.b16 %v608
  %v774 = vunpack.c.l.b16 %v609
  %v775 = vunpack.c.h.b16 %v609
  %v776 = vunpack.c.l.b16 %v610
  %v777 = vunpack.c.h.b16 %v610
  %v778 = vunpack.c.l.b16 %v611
  %v779 = vunpack.c.h.b16 %v611
  %v780 = vunpack.c.l.b16 %v612
  %v781 = vunpack.c.h.b16 %v612
  %v782 = vunpack.c.l.b16 %v613
  %v783 = vunpack.c.h.b16 %v613
  %v784 = vunpack.c.l.b16 %v614
  %v785 = vunpack.c.h.b16 %v614
  %v786 = vunpack.c.l.b16 %v615
  %v787 = vunpack.c.h.b16 %v615
  %v788 = vunpack.c.l.b16 %v616
  %v789 = vunpack.c.h.b16 %v616
  %v790 = vunpack.c.l.b16 %v617
  %v791 = vunpack.c.h.b16 %v617
  %v792 = vunpack.c.l.b16 %v618
  %v793 = vunpack.c.h.b16 %v618
  %v794 = vunpack.c.l.b16 %v619
  %v795 = vunpack.c.h.b16 %v619
  %v796 = vunpack.c.l.b16 %v620
  %v797 = vunpack.c.h.b16 %v620
  %v798 = vunpack.c.l.b16 %v621
  %v799 = vunpack.c.h.b16 %v621
  %v800 = vunpack.c.l.b16 %v622
  %v801 = vunpack.c.h.b16 %v622
  %v802 = vunpack.c.l.b16 %v623
  %v803 = vunpack.c.h.b16 %v623
  %v804 = vunpack.c.l.b16 %v624
  %v805 = vunpack.c.h.b16 %v624
  %v806 = vunpack.c.l.b16 %v625
  %v807 = vunpack.c.h.b16 %v625
  %v808 = vunpack.c.l.b16 %v626
  %v809 = vunpack.c.h.b16 %v626
  %v810 = vunpack.c.l.b16 %v627
  %v811 = vunpack.c.h.b16 %v627
  %v812 = vunpack.c.l.b16 %v628
  %v813 = vunpack.c.h.b16 %v628
  %v814 = vunpack.c.l.b16 %v629
  %v815 = vunpack.c.h.b16 %v629
  %v816 = vunpack.c.l.b16 %v630
  %v817 = vunpack.c.h.b16 %v630
  %v818 = vunpack.c.l.b16 %v631
  %v819 = vunpack.c.h.b16 %v631
  %v820 = vunpack.c.l.b16 %v632
  %v821 = vunpack.c.h.b16 %v632
  %v822 = vunpack.c.l.b16 %v633
  %v823 = vunpack.c.h.b16 %v633
  %v824 = vunpack.c.l.b16 %v634
  %v825 = vunpack.c.h.b16 %v634
  %v826 = vunpack.c.l.b16 %v635
  %v827 = vunpack.c.h.b16 %v635
  %v828 = vpack.c.b16 %v708, %v700
  %v829 = vpack.c.b16 %v709, %v701
  %v830 = vpack.c.b16 %v710, %v702
  %v831 = vpack.c.b16 %v711, %v703
  %v832 = vpack.c.b16 %v712, %v704
  %v833 = vpack.c.b16 %v713, %v705
  %v834 = vpack.c.b16 %v714, %v706
  %v835 = vpack.c.b16 %v715, %v707
  %v836 = vpack.c.b16 %v724, %v716
  %v837 = vpack.c.b16 %v725, %v717
  %v838 = vpack.c.b16 %v726, %v718
  %v839 = vpack.c.b16 %v727, %v719
  %v840 = vpack.c.b16 %v728, %v720
  %v841 = vpack.c.b16 %v729, %v721
  %v842 = vpack.c.b16 %v730, %v722
  %v843 = vpack.c.b16 %v731, %v723
  %v844 = vpack.c.b16 %v740, %v732
  %v845 = vpack.c.b16 %v741, %v733
  %v846 = vpack.c.b16 %v742, %v734
  %v847 = vpack.c.b16 %v743, %v735
  %v848 = vpack.c.b16 %v744, %v736
  %v849 = vpack.c.b16 %v745, %v737
  %v850 = vpack.c.b16 %v746, %v738
  %v851 = vpack.c.b16 %v747, %v739
  %v852 = vpack.c.b16 %v756, %v748
  %v853 = vpack.c.b16 %v757, %v749
  %v854 = vpack.c.b16 %v758, %v750
  %v855 = vpack.c.b16 %v759, %v751
  %v856 = vpack.c.b16 %v760, %v752
  %v857 = vpack.c.b16 %v761, %v753
  %v858 = vpack.c.b16 %v762, %v754
  %v859 = vpack.c.b16 %v763, %v755
  %v860 = vpack.c.b16 %v772, %v764
  %v861 = vpack.c.b16 %v773, %v765
  %v862 = vpack.c.b16 %v774, %v766
  %v863 = vpack.c.b16 %v775, %v767
  %v864 = vpack.c.b16 %v776, %v768
  %v865 = vpack.c.b16 %v777, %v769
  %v866 = vpack.c.b16 %v778, %v770
  %v867 = vpack.c.b16 %v779, %v771
  %v868 = vpack.c.b16 %v788, %v780
  %v869 = vpack.c.b16 %v789, %v781
  %v870 = vpack.c.b16 %v790, %v782
  %v871 = vpack.c.b16 %v791, %v783
  %v872 = vpack.c.b16 %v792, %v784
  %v873 = vpack.c.b16 %v793, %v785
  %v874 = vpack.c.b16 %v794, %v786
  %v875 = vpack.c.b16 %v795, %v787
  %v876 = vpack.c.b16 %v804, %v796
  %v877 = vpack.c.b16 %v805, %v797
  %v878 = vpack.c.b16 %v806, %v798
  %v879 = vpack.c.b16 %v807, %v799
  %v880 = vpack.c.b16 %v808, %v800
  %v881 = vpack.c.b16 %v809, %v801
  %v882 = vpack.c.b16 %v810, %v802
  %v883 = vpack.c.b16 %v811, %v803
  %v884 = vpack.c.b16 %v820, %v812
  %v885 = vpack.c.b16 %v821, %v813
  %v886 = vpack.c.b16 %v822, %v814
  %v887 = vpack.c.b16 %v823, %v815
  %v888 = vpack.c.b16 %v824, %v816
  %v889 = vpack.c.b16 %v825, %v817
  %v890 = vpack.c.b16 %v826, %v818
  %v891 = vpack.c.b16 %v827, %v819
  %956 = vmatpush.bf16.msra.mxu0 %v884
  %957 = vmatpush.bf16.msra.mxu0 %v876
  %958 = vmatpush.bf16.msra.mxu0 %v868
  %959 = vmatpush.bf16.msra.mxu0 %v860
  %960 = vmatpush.bf16.msra.mxu0 %v852
  %961 = vmatpush.bf16.msra.mxu0 %v844
  %962 = vmatpush.bf16.msra.mxu0 %v836
  %963 = vmatpush.bf16.msra.mxu0 %v828
  %964 = vmatmul.bf16.gmra.mxu0 %v513
  %v965 = vpop.f32.mrf.mxu0
  %v966 = vadd.f32 0.0, %v965
  %v967 = vpop.f32.mrf.mxu0
  %968 = vdwg.mxu0
  %969 = vmatpush.bf16.msra.mxu0 %v885
  %970 = vmatpush.bf16.msra.mxu0 %v877
  %971 = vmatpush.bf16.msra.mxu0 %v869
  %972 = vmatpush.bf16.msra.mxu0 %v861
  %973 = vmatpush.bf16.msra.mxu0 %v853
  %974 = vmatpush.bf16.msra.mxu0 %v845
  %975 = vmatpush.bf16.msra.mxu0 %v837
  %976 = vmatpush.bf16.msra.mxu0 %v829
  %977 = vmatmul.bf16.gmra.mxu0 %v513
  %v978 = vpop.f32.mrf.mxu0
  %v979 = vadd.f32 0.0, %v978
  %v980 = vpop.f32.mrf.mxu0
  %981 = vdwg.mxu0
  %982 = vmatpush.bf16.msra.mxu0 %v886
  %983 = vmatpush.bf16.msra.mxu0 %v878
  %984 = vmatpush.bf16.msra.mxu0 %v870
  %985 = vmatpush.bf16.msra.mxu0 %v862
  %986 = vmatpush.bf16.msra.mxu0 %v854
  %987 = vmatpush.bf16.msra.mxu0 %v846
  %988 = vmatpush.bf16.msra.mxu0 %v838
  %989 = vmatpush.bf16.msra.mxu0 %v830
  %990 = vmatmul.bf16.gmra.mxu0 %v513
  %v991 = vpop.f32.mrf.mxu0
  %v992 = vadd.f32 0.0, %v991
  %v993 = vpop.f32.mrf.mxu0
  %994 = vdwg.mxu0
  %995 = vmatpush.bf16.msra.mxu0 %v887
  %996 = vmatpush.bf16.msra.mxu0 %v879
  %997 = vmatpush.bf16.msra.mxu0 %v871
  %998 = vmatpush.bf16.msra.mxu0 %v863
  %999 = vmatpush.bf16.msra.mxu0 %v855
  %1000 = vmatpush.bf16.msra.mxu0 %v847
  %1001 = vmatpush.bf16.msra.mxu0 %v839
  %1002 = vmatpush.bf16.msra.mxu0 %v831
  %1003 = vmatmul.bf16.gmra.mxu0 %v513
  %v1004 = vpop.f32.mrf.mxu0
  %v1005 = vadd.f32 0.0, %v1004
  %v1006 = vpop.f32.mrf.mxu0
  %1007 = vdwg.mxu0
  %1008 = vmatpush.bf16.msra.mxu0 %v888
  %1009 = vmatpush.bf16.msra.mxu0 %v880
  %1010 = vmatpush.bf16.msra.mxu0 %v872
  %1011 = vmatpush.bf16.msra.mxu0 %v864
  %1012 = vmatpush.bf16.msra.mxu0 %v856
  %1013 = vmatpush.bf16.msra.mxu0 %v848
  %1014 = vmatpush.bf16.msra.mxu0 %v840
  %1015 = vmatpush.bf16.msra.mxu0 %v832
  %1016 = vmatmul.bf16.gmra.mxu0 %v513
  %v1017 = vpop.f32.mrf.mxu0
  %v1018 = vadd.f32 0.0, %v1017
  %v1019 = vpop.f32.mrf.mxu0
  %1020 = vdwg.mxu0
  %1021 = vmatpush.bf16.msra.mxu0 %v889
  %1022 = vmatpush.bf16.msra.mxu0 %v881
  %1023 = vmatpush.bf16.msra.mxu0 %v873
  %1024 = vmatpush.bf16.msra.mxu0 %v865
  %1025 = vmatpush.bf16.msra.mxu0 %v857
  %1026 = vmatpush.bf16.msra.mxu0 %v849
  %1027 = vmatpush.bf16.msra.mxu0 %v841
  %1028 = vmatpush.bf16.msra.mxu0 %v833
  %1029 = vmatmul.bf16.gmra.mxu0 %v513
  %v1030 = vpop.f32.mrf.mxu0
  %v1031 = vadd.f32 0.0, %v1030
  %v1032 = vpop.f32.mrf.mxu0
  %1033 = vdwg.mxu0
  %1034 = vmatpush.bf16.msra.mxu0 %v890
  %1035 = vmatpush.bf16.msra.mxu0 %v882
  %1036 = vmatpush.bf16.msra.mxu0 %v874
  %1037 = vmatpush.bf16.msra.mxu0 %v866
  %1038 = vmatpush.bf16.msra.mxu0 %v858
  %1039 = vmatpush.bf16.msra.mxu0 %v850
  %1040 = vmatpush.bf16.msra.mxu0 %v842
  %1041 = vmatpush.bf16.msra.mxu0 %v834
  %1042 = vmatmul.bf16.gmra.mxu0 %v513
  %v1043 = vpop.f32.mrf.mxu0
  %v1044 = vadd.f32 0.0, %v1043
  %v1045 = vpop.f32.mrf.mxu0
  %1046 = vdwg.mxu0
  %1047 = vmatpush.bf16.msra.mxu0 %v891
  %1048 = vmatpush.bf16.msra.mxu0 %v883
  %1049 = vmatpush.bf16.msra.mxu0 %v875
  %1050 = vmatpush.bf16.msra.mxu0 %v867
  %1051 = vmatpush.bf16.msra.mxu0 %v859
  %1052 = vmatpush.bf16.msra.mxu0 %v851
  %1053 = vmatpush.bf16.msra.mxu0 %v843
  %1054 = vmatpush.bf16.msra.mxu0 %v835
  %1055 = vmatmul.bf16.gmra.mxu0 %v513
  %v1056 = vpop.f32.mrf.mxu0
  %v1057 = vadd.f32 0.0, %v1056
  %v1058 = vpop.f32.mrf.mxu0
  %1059 = vdwg.mxu0
  %v1060 = vadd.f32 %v564, %v966
  %v1061 = vadd.f32 %v565, %v979
  %v1062 = vadd.f32 %v566, %v992
  %v1063 = vadd.f32 %v567, %v1005
  %v1064 = vadd.f32 %v568, %v1018
  %v1065 = vadd.f32 %v569, %v1031
  %v1066 = vadd.f32 %v570, %v1044
  %v1067 = vadd.f32 %v571, %v1057
  %v1068 = vmax.f32 %v1060, 0.0
  %v1069 = vmax.f32 %v1061, 0.0
  %v1070 = vmax.f32 %v1062, 0.0
  %v1071 = vmax.f32 %v1063, 0.0
  %v1072 = vmax.f32 %v1064, 0.0
  %v1073 = vmax.f32 %v1065, 0.0
  %v1074 = vmax.f32 %v1066, 0.0
  %v1075 = vmax.f32 %v1067, 0.0
  %v1076 = vpack.c.bf16 %v1068, %v1068
  %v1077 = vpack.c.bf16 %v1069, %v1069
  %v1078 = vpack.c.bf16 %v1070, %v1070
  %v1079 = vpack.c.bf16 %v1071, %v1071
  %v1080 = vpack.c.bf16 %v1072, %v1072
  %v1081 = vpack.c.bf16 %v1073, %v1073
  %v1082 = vpack.c.bf16 %v1074, %v1074
  %v1083 = vpack.c.bf16 %v1075, %v1075
  %v1084 = vld [vmem:[%s10] sm:$0xf]
  %v1085 = vld [vmem:[%s10 + $0x4] sm:$0xf]
  %v1086 = vld [vmem:[%s10 + $0x8] sm:$0xf]
  %v1087 = vld [vmem:[%s10 + $0xc] sm:$0xf]
  %v1088 = vld [vmem:[%s10 + $0x10] sm:$0xf]
  %v1089 = vld [vmem:[%s10 + $0x14] sm:$0xf]
  %v1090 = vld [vmem:[%s10 + $0x18] sm:$0xf]
  %v1091 = vld [vmem:[%s10 + $0x1c] sm:$0xf]
  %v1092 = vld [vmem:[%s10 + $0x20] sm:$0xf]
  %v1093 = vld [vmem:[%s10 + $0x24] sm:$0xf]
  %v1094 = vld [vmem:[%s10 + $0x28] sm:$0xf]
  %v1095 = vld [vmem:[%s10 + $0x2c] sm:$0xf]
  %v1096 = vld [vmem:[%s10 + $0x30] sm:$0xf]
  %v1097 = vld [vmem:[%s10 + $0x34] sm:$0xf]
  %v1098 = vld [vmem:[%s10 + $0x38] sm:$0xf]
  %v1099 = vld [vmem:[%s10 + $0x3c] sm:$0xf]
  %v1100 = vld [vmem:[%s10 + $0x40] sm:$0xf]
  %v1101 = vld [vmem:[%s10 + $0x44] sm:$0xf]
  %v1102 = vld [vmem:[%s10 + $0x48] sm:$0xf]
  %v1103 = vld [vmem:[%s10 + $0x4c] sm:$0xf]
  %v1104 = vld [vmem:[%s10 + $0x50] sm:$0xf]
  %v1105 = vld [vmem:[%s10 + $0x54] sm:$0xf]
  %v1106 = vld [vmem:[%s10 + $0x58] sm:$0xf]
  %v1107 = vld [vmem:[%s10 + $0x5c] sm:$0xf]
  %v1108 = vld [vmem:[%s10 + $0x60] sm:$0xf]
  %v1109 = vld [vmem:[%s10 + $0x64] sm:$0xf]
  %v1110 = vld [vmem:[%s10 + $0x68] sm:$0xf]
  %v1111 = vld [vmem:[%s10 + $0x6c] sm:$0xf]
  %v1112 = vld [vmem:[%s10 + $0x70] sm:$0xf]
  %v1113 = vld [vmem:[%s10 + $0x74] sm:$0xf]
  %v1114 = vld [vmem:[%s10 + $0x78] sm:$0xf]
  %v1115 = vld [vmem:[%s10 + $0x7c] sm:$0xf]
  %v1116 = vld [vmem:[%s10 + $0x80] sm:$0xf]
  %v1117 = vld [vmem:[%s10 + $0x84] sm:$0xf]
  %v1118 = vld [vmem:[%s10 + $0x88] sm:$0xf]
  %v1119 = vld [vmem:[%s10 + $0x8c] sm:$0xf]
  %v1120 = vld [vmem:[%s10 + $0x90] sm:$0xf]
  %v1121 = vld [vmem:[%s10 + $0x94] sm:$0xf]
  %v1122 = vld [vmem:[%s10 + $0x98] sm:$0xf]
  %v1123 = vld [vmem:[%s10 + $0x9c] sm:$0xf]
  %v1124 = vld [vmem:[%s10 + $0xa0] sm:$0xf]
  %v1125 = vld [vmem:[%s10 + $0xa4] sm:$0xf]
  %v1126 = vld [vmem:[%s10 + $0xa8] sm:$0xf]
  %v1127 = vld [vmem:[%s10 + $0xac] sm:$0xf]
  %v1128 = vld [vmem:[%s10 + $0xb0] sm:$0xf]
  %v1129 = vld [vmem:[%s10 + $0xb4] sm:$0xf]
  %v1130 = vld [vmem:[%s10 + $0xb8] sm:$0xf]
  %v1131 = vld [vmem:[%s10 + $0xbc] sm:$0xf]
  %v1132 = vld [vmem:[%s10 + $0xc0] sm:$0xf]
  %v1133 = vld [vmem:[%s10 + $0xc4] sm:$0xf]
  %v1134 = vld [vmem:[%s10 + $0xc8] sm:$0xf]
  %v1135 = vld [vmem:[%s10 + $0xcc] sm:$0xf]
  %v1136 = vld [vmem:[%s10 + $0xd0] sm:$0xf]
  %v1137 = vld [vmem:[%s10 + $0xd4] sm:$0xf]
  %v1138 = vld [vmem:[%s10 + $0xd8] sm:$0xf]
  %v1139 = vld [vmem:[%s10 + $0xdc] sm:$0xf]
  %v1140 = vld [vmem:[%s10 + $0xe0] sm:$0xf]
  %v1141 = vld [vmem:[%s10 + $0xe4] sm:$0xf]
  %v1142 = vld [vmem:[%s10 + $0xe8] sm:$0xf]
  %v1143 = vld [vmem:[%s10 + $0xec] sm:$0xf]
  %v1144 = vld [vmem:[%s10 + $0xf0] sm:$0xf]
  %v1145 = vld [vmem:[%s10 + $0xf4] sm:$0xf]
  %v1146 = vld [vmem:[%s10 + $0xf8] sm:$0xf]
  %v1147 = vld [vmem:[%s10 + $0xfc] sm:$0xf]
  %v1148 = vld [vmem:[%s10 + $0x100] sm:$0xf]
  %v1149 = vld [vmem:[%s10 + $0x104] sm:$0xf]
  %v1150 = vld [vmem:[%s10 + $0x108] sm:$0xf]
  %v1151 = vld [vmem:[%s10 + $0x10c] sm:$0xf]
  %v1152 = vld [vmem:[%s10 + $0x110] sm:$0xf]
  %v1153 = vld [vmem:[%s10 + $0x114] sm:$0xf]
  %v1154 = vld [vmem:[%s10 + $0x118] sm:$0xf]
  %v1155 = vld [vmem:[%s10 + $0x11c] sm:$0xf]
  %v1156 = vld [vmem:[%s10 + $0x120] sm:$0xf]
  %v1157 = vld [vmem:[%s10 + $0x124] sm:$0xf]
  %v1158 = vld [vmem:[%s10 + $0x128] sm:$0xf]
  %v1159 = vld [vmem:[%s10 + $0x12c] sm:$0xf]
  %v1160 = vld [vmem:[%s10 + $0x130] sm:$0xf]
  %v1161 = vld [vmem:[%s10 + $0x134] sm:$0xf]
  %v1162 = vld [vmem:[%s10 + $0x138] sm:$0xf]
  %v1163 = vld [vmem:[%s10 + $0x13c] sm:$0xf]
  %v1164 = vld [vmem:[%s10 + $0x140] sm:$0xf]
  %v1165 = vld [vmem:[%s10 + $0x144] sm:$0xf]
  %v1166 = vld [vmem:[%s10 + $0x148] sm:$0xf]
  %v1167 = vld [vmem:[%s10 + $0x14c] sm:$0xf]
  %v1168 = vld [vmem:[%s10 + $0x150] sm:$0xf]
  %v1169 = vld [vmem:[%s10 + $0x154] sm:$0xf]
  %v1170 = vld [vmem:[%s10 + $0x158] sm:$0xf]
  %v1171 = vld [vmem:[%s10 + $0x15c] sm:$0xf]
  %v1172 = vld [vmem:[%s10 + $0x160] sm:$0xf]
  %v1173 = vld [vmem:[%s10 + $0x164] sm:$0xf]
  %v1174 = vld [vmem:[%s10 + $0x168] sm:$0xf]
  %v1175 = vld [vmem:[%s10 + $0x16c] sm:$0xf]
  %v1176 = vld [vmem:[%s10 + $0x170] sm:$0xf]
  %v1177 = vld [vmem:[%s10 + $0x174] sm:$0xf]
  %v1178 = vld [vmem:[%s10 + $0x178] sm:$0xf]
  %v1179 = vld [vmem:[%s10 + $0x17c] sm:$0xf]
  %v1180 = vld [vmem:[%s10 + $0x180] sm:$0xf]
  %v1181 = vld [vmem:[%s10 + $0x184] sm:$0xf]
  %v1182 = vld [vmem:[%s10 + $0x188] sm:$0xf]
  %v1183 = vld [vmem:[%s10 + $0x18c] sm:$0xf]
  %v1184 = vld [vmem:[%s10 + $0x190] sm:$0xf]
  %v1185 = vld [vmem:[%s10 + $0x194] sm:$0xf]
  %v1186 = vld [vmem:[%s10 + $0x198] sm:$0xf]
  %v1187 = vld [vmem:[%s10 + $0x19c] sm:$0xf]
  %v1188 = vld [vmem:[%s10 + $0x1a0] sm:$0xf]
  %v1189 = vld [vmem:[%s10 + $0x1a4] sm:$0xf]
  %v1190 = vld [vmem:[%s10 + $0x1a8] sm:$0xf]
  %v1191 = vld [vmem:[%s10 + $0x1ac] sm:$0xf]
  %v1192 = vld [vmem:[%s10 + $0x1b0] sm:$0xf]
  %v1193 = vld [vmem:[%s10 + $0x1b4] sm:$0xf]
  %v1194 = vld [vmem:[%s10 + $0x1b8] sm:$0xf]
  %v1195 = vld [vmem:[%s10 + $0x1bc] sm:$0xf]
  %v1196 = vld [vmem:[%s10 + $0x1c0] sm:$0xf]
  %v1197 = vld [vmem:[%s10 + $0x1c4] sm:$0xf]
  %v1198 = vld [vmem:[%s10 + $0x1c8] sm:$0xf]
  %v1199 = vld [vmem:[%s10 + $0x1cc] sm:$0xf]
  %v1200 = vld [vmem:[%s10 + $0x1d0] sm:$0xf]
  %v1201 = vld [vmem:[%s10 + $0x1d4] sm:$0xf]
  %v1202 = vld [vmem:[%s10 + $0x1d8] sm:$0xf]
  %v1203 = vld [vmem:[%s10 + $0x1dc] sm:$0xf]
  %v1204 = vld [vmem:[%s10 + $0x1e0] sm:$0xf]
  %v1205 = vld [vmem:[%s10 + $0x1e4] sm:$0xf]
  %v1206 = vld [vmem:[%s10 + $0x1e8] sm:$0xf]
  %v1207 = vld [vmem:[%s10 + $0x1ec] sm:$0xf]
  %v1208 = vld [vmem:[%s10 + $0x1f0] sm:$0xf]
  %v1209 = vld [vmem:[%s10 + $0x1f4] sm:$0xf]
  %v1210 = vld [vmem:[%s10 + $0x1f8] sm:$0xf]
  %v1211 = vld [vmem:[%s10 + $0x1fc] sm:$0xf]
  %v1212 = vld [vmem:[%s11] sm:$0x1]
  %v1214 = vperm.slane %v1212, 0
  %v1344 = vunpack.c.l.b16 %v1084
  %v1345 = vunpack.c.l.b16 %v1085
  %v1346 = vunpack.c.l.b16 %v1086
  %v1347 = vunpack.c.l.b16 %v1087
  %v1348 = vunpack.c.l.b16 %v1088
  %v1349 = vunpack.c.l.b16 %v1089
  %v1350 = vunpack.c.l.b16 %v1090
  %v1351 = vunpack.c.l.b16 %v1091
  %v1352 = vunpack.c.l.b16 %v1092
  %v1353 = vunpack.c.l.b16 %v1093
  %v1354 = vunpack.c.l.b16 %v1094
  %v1355 = vunpack.c.l.b16 %v1095
  %v1356 = vunpack.c.l.b16 %v1096
  %v1357 = vunpack.c.l.b16 %v1097
  %v1358 = vunpack.c.l.b16 %v1098
  %v1359 = vunpack.c.l.b16 %v1099
  %v1360 = vunpack.c.l.b16 %v1100
  %v1361 = vunpack.c.l.b16 %v1101
  %v1362 = vunpack.c.l.b16 %v1102
  %v1363 = vunpack.c.l.b16 %v1103
  %v1364 = vunpack.c.l.b16 %v1104
  %v1365 = vunpack.c.l.b16 %v1105
  %v1366 = vunpack.c.l.b16 %v1106
  %v1367 = vunpack.c.l.b16 %v1107
  %v1368 = vunpack.c.l.b16 %v1108
  %v1369 = vunpack.c.l.b16 %v1109
  %v1370 = vunpack.c.l.b16 %v1110
  %v1371 = vunpack.c.l.b16 %v1111
  %v1372 = vunpack.c.l.b16 %v1112
  %v1373 = vunpack.c.l.b16 %v1113
  %v1374 = vunpack.c.l.b16 %v1114
  %v1375 = vunpack.c.l.b16 %v1115
  %v1376 = vunpack.c.l.b16 %v1116
  %v1377 = vunpack.c.l.b16 %v1117
  %v1378 = vunpack.c.l.b16 %v1118
  %v1379 = vunpack.c.l.b16 %v1119
  %v1380 = vunpack.c.l.b16 %v1120
  %v1381 = vunpack.c.l.b16 %v1121
  %v1382 = vunpack.c.l.b16 %v1122
  %v1383 = vunpack.c.l.b16 %v1123
  %v1384 = vunpack.c.l.b16 %v1124
  %v1385 = vunpack.c.l.b16 %v1125
  %v1386 = vunpack.c.l.b16 %v1126
  %v1387 = vunpack.c.l.b16 %v1127
  %v1388 = vunpack.c.l.b16 %v1128
  %v1389 = vunpack.c.l.b16 %v1129
  %v1390 = vunpack.c.l.b16 %v1130
  %v1391 = vunpack.c.l.b16 %v1131
  %v1392 = vunpack.c.l.b16 %v1132
  %v1393 = vunpack.c.l.b16 %v1133
  %v1394 = vunpack.c.l.b16 %v1134
  %v1395 = vunpack.c.l.b16 %v1135
  %v1396 = vunpack.c.l.b16 %v1136
  %v1397 = vunpack.c.l.b16 %v1137
  %v1398 = vunpack.c.l.b16 %v1138
  %v1399 = vunpack.c.l.b16 %v1139
  %v1400 = vunpack.c.l.b16 %v1140
  %v1401 = vunpack.c.l.b16 %v1141
  %v1402 = vunpack.c.l.b16 %v1142
  %v1403 = vunpack.c.l.b16 %v1143
  %v1404 = vunpack.c.l.b16 %v1144
  %v1405 = vunpack.c.l.b16 %v1145
  %v1406 = vunpack.c.l.b16 %v1146
  %v1407 = vunpack.c.l.b16 %v1147
  %v1408 = vunpack.c.l.b16 %v1148
  %v1409 = vunpack.c.l.b16 %v1149
  %v1410 = vunpack.c.l.b16 %v1150
  %v1411 = vunpack.c.l.b16 %v1151
  %v1412 = vunpack.c.l.b16 %v1152
  %v1413 = vunpack.c.l.b16 %v1153
  %v1414 = vunpack.c.l.b16 %v1154
  %v1415 = vunpack.c.l.b16 %v1155
  %v1416 = vunpack.c.l.b16 %v1156
  %v1417 = vunpack.c.l.b16 %v1157
  %v1418 = vunpack.c.l.b16 %v1158
  %v1419 = vunpack.c.l.b16 %v1159
  %v1420 = vunpack.c.l.b16 %v1160
  %v1421 = vunpack.c.l.b16 %v1161
  %v1422 = vunpack.c.l.b16 %v1162
  %v1423 = vunpack.c.l.b16 %v1163
  %v1424 = vunpack.c.l.b16 %v1164
  %v1425 = vunpack.c.l.b16 %v1165
  %v1426 = vunpack.c.l.b16 %v1166
  %v1427 = vunpack.c.l.b16 %v1167
  %v1428 = vunpack.c.l.b16 %v1168
  %v1429 = vunpack.c.l.b16 %v1169
  %v1430 = vunpack.c.l.b16 %v1170
  %v1431 = vunpack.c.l.b16 %v1171
  %v1432 = vunpack.c.l.b16 %v1172
  %v1433 = vunpack.c.l.b16 %v1173
  %v1434 = vunpack.c.l.b16 %v1174
  %v1435 = vunpack.c.l.b16 %v1175
  %v1436 = vunpack.c.l.b16 %v1176
  %v1437 = vunpack.c.l.b16 %v1177
  %v1438 = vunpack.c.l.b16 %v1178
  %v1439 = vunpack.c.l.b16 %v1179
  %v1440 = vunpack.c.l.b16 %v1180
  %v1441 = vunpack.c.l.b16 %v1181
  %v1442 = vunpack.c.l.b16 %v1182
  %v1443 = vunpack.c.l.b16 %v1183
  %v1444 = vunpack.c.l.b16 %v1184
  %v1445 = vunpack.c.l.b16 %v1185
  %v1446 = vunpack.c.l.b16 %v1186
  %v1447 = vunpack.c.l.b16 %v1187
  %v1448 = vunpack.c.l.b16 %v1188
  %v1449 = vunpack.c.l.b16 %v1189
  %v1450 = vunpack.c.l.b16 %v1190
  %v1451 = vunpack.c.l.b16 %v1191
  %v1452 = vunpack.c.l.b16 %v1192
  %v1453 = vunpack.c.l.b16 %v1193
  %v1454 = vunpack.c.l.b16 %v1194
  %v1455 = vunpack.c.l.b16 %v1195
  %v1456 = vunpack.c.l.b16 %v1196
  %v1457 = vunpack.c.l.b16 %v1197
  %v1458 = vunpack.c.l.b16 %v1198
  %v1459 = vunpack.c.l.b16 %v1199
  %v1460 = vunpack.c.l.b16 %v1200
  %v1461 = vunpack.c.l.b16 %v1201
  %v1462 = vunpack.c.l.b16 %v1202
  %v1463 = vunpack.c.l.b16 %v1203
  %v1464 = vunpack.c.l.b16 %v1204
  %v1465 = vunpack.c.l.b16 %v1205
  %v1466 = vunpack.c.l.b16 %v1206
  %v1467 = vunpack.c.l.b16 %v1207
  %v1468 = vunpack.c.l.b16 %v1208
  %v1469 = vunpack.c.l.b16 %v1209
  %v1470 = vunpack.c.l.b16 %v1210
  %v1471 = vunpack.c.l.b16 %v1211
  %v1472 = vpack.c.b16 %v1345, %v1344
  %v1473 = vpack.c.b16 %v1347, %v1346
  %v1474 = vpack.c.b16 %v1349, %v1348
  %v1475 = vpack.c.b16 %v1351, %v1350
  %v1476 = vpack.c.b16 %v1353, %v1352
  %v1477 = vpack.c.b16 %v1355, %v1354
  %v1478 = vpack.c.b16 %v1357, %v1356
  %v1479 = vpack.c.b16 %v1359, %v1358
  %v1480 = vpack.c.b16 %v1361, %v1360
  %v1481 = vpack.c.b16 %v1363, %v1362
  %v1482 = vpack.c.b16 %v1365, %v1364
  %v1483 = vpack.c.b16 %v1367, %v1366
  %v1484 = vpack.c.b16 %v1369, %v1368
  %v1485 = vpack.c.b16 %v1371, %v1370
  %v1486 = vpack.c.b16 %v1373, %v1372
  %v1487 = vpack.c.b16 %v1375, %v1374
  %v1488 = vpack.c.b16 %v1377, %v1376
  %v1489 = vpack.c.b16 %v1379, %v1378
  %v1490 = vpack.c.b16 %v1381, %v1380
  %v1491 = vpack.c.b16 %v1383, %v1382
  %v1492 = vpack.c.b16 %v1385, %v1384
  %v1493 = vpack.c.b16 %v1387, %v1386
  %v1494 = vpack.c.b16 %v1389, %v1388
  %v1495 = vpack.c.b16 %v1391, %v1390
  %v1496 = vpack.c.b16 %v1393, %v1392
  %v1497 = vpack.c.b16 %v1395, %v1394
  %v1498 = vpack.c.b16 %v1397, %v1396
  %v1499 = vpack.c.b16 %v1399, %v1398
  %v1500 = vpack.c.b16 %v1401, %v1400
  %v1501 = vpack.c.b16 %v1403, %v1402
  %v1502 = vpack.c.b16 %v1405, %v1404
  %v1503 = vpack.c.b16 %v1407, %v1406
  %v1504 = vpack.c.b16 %v1409, %v1408
  %v1505 = vpack.c.b16 %v1411, %v1410
  %v1506 = vpack.c.b16 %v1413, %v1412
  %v1507 = vpack.c.b16 %v1415, %v1414
  %v1508 = vpack.c.b16 %v1417, %v1416
  %v1509 = vpack.c.b16 %v1419, %v1418
  %v1510 = vpack.c.b16 %v1421, %v1420
  %v1511 = vpack.c.b16 %v1423, %v1422
  %v1512 = vpack.c.b16 %v1425, %v1424
  %v1513 = vpack.c.b16 %v1427, %v1426
  %v1514 = vpack.c.b16 %v1429, %v1428
  %v1515 = vpack.c.b16 %v1431, %v1430
  %v1516 = vpack.c.b16 %v1433, %v1432
  %v1517 = vpack.c.b16 %v1435, %v1434
  %v1518 = vpack.c.b16 %v1437, %v1436
  %v1519 = vpack.c.b16 %v1439, %v1438
  %v1520 = vpack.c.b16 %v1441, %v1440
  %v1521 = vpack.c.b16 %v1443, %v1442
  %v1522 = vpack.c.b16 %v1445, %v1444
  %v1523 = vpack.c.b16 %v1447, %v1446
  %v1524 = vpack.c.b16 %v1449, %v1448
  %v1525 = vpack.c.b16 %v1451, %v1450
  %v1526 = vpack.c.b16 %v1453, %v1452
  %v1527 = vpack.c.b16 %v1455, %v1454
  %v1528 = vpack.c.b16 %v1457, %v1456
  %v1529 = vpack.c.b16 %v1459, %v1458
  %v1530 = vpack.c.b16 %v1461, %v1460
  %v1531 = vpack.c.b16 %v1463, %v1462
  %v1532 = vpack.c.b16 %v1465, %v1464
  %v1533 = vpack.c.b16 %v1467, %v1466
  %v1534 = vpack.c.b16 %v1469, %v1468
  %v1535 = vpack.c.b16 %v1471, %v1470
  %1600 = vmatpush.bf16.msra.mxu0 %v1479
  %1601 = vmatpush.bf16.msra.mxu0 %v1478
  %1602 = vmatpush.bf16.msra.mxu0 %v1477
  %1603 = vmatpush.bf16.msra.mxu0 %v1476
  %1604 = vmatpush.bf16.msra.mxu0 %v1475
  %1605 = vmatpush.bf16.msra.mxu0 %v1474
  %1606 = vmatpush.bf16.msra.mxu0 %v1473
  %1607 = vmatpush.bf16.msra.mxu0 %v1472
  %1608 = vmatmul.bf16.gmra.mxu0 %v1076
  %v1609 = vpop.f32.mrf.mxu0
  %v1610 = vadd.f32 %v1214, %v1609
  %v1611 = vpop.f32.mrf.mxu0
  %1612 = vdwg.mxu0
  %1613 = vmatpush.bf16.msra.mxu0 %v1487
  %1614 = vmatpush.bf16.msra.mxu0 %v1486
  %1615 = vmatpush.bf16.msra.mxu0 %v1485
  %1616 = vmatpush.bf16.msra.mxu0 %v1484
  %1617 = vmatpush.bf16.msra.mxu0 %v1483
  %1618 = vmatpush.bf16.msra.mxu0 %v1482
  %1619 = vmatpush.bf16.msra.mxu0 %v1481
  %1620 = vmatpush.bf16.msra.mxu0 %v1480
  %1621 = vmatmul.bf16.gmra.mxu0 %v1077
  %v1622 = vpop.f32.mrf.mxu0
  %v1623 = vadd.f32 %v1610, %v1622
  %v1624 = vpop.f32.mrf.mxu0
  %1625 = vdwg.mxu0
  %1626 = vmatpush.bf16.msra.mxu0 %v1495
  %1627 = vmatpush.bf16.msra.mxu0 %v1494
  %1628 = vmatpush.bf16.msra.mxu0 %v1493
  %1629 = vmatpush.bf16.msra.mxu0 %v1492
  %1630 = vmatpush.bf16.msra.mxu0 %v1491
  %1631 = vmatpush.bf16.msra.mxu0 %v1490
  %1632 = vmatpush.bf16.msra.mxu0 %v1489
  %1633 = vmatpush.bf16.msra.mxu0 %v1488
  %1634 = vmatmul.bf16.gmra.mxu0 %v1078
  %v1635 = vpop.f32.mrf.mxu0
  %v1636 = vadd.f32 %v1623, %v1635
  %v1637 = vpop.f32.mrf.mxu0
  %1638 = vdwg.mxu0
  %1639 = vmatpush.bf16.msra.mxu0 %v1503
  %1640 = vmatpush.bf16.msra.mxu0 %v1502
  %1641 = vmatpush.bf16.msra.mxu0 %v1501
  %1642 = vmatpush.bf16.msra.mxu0 %v1500
  %1643 = vmatpush.bf16.msra.mxu0 %v1499
  %1644 = vmatpush.bf16.msra.mxu0 %v1498
  %1645 = vmatpush.bf16.msra.mxu0 %v1497
  %1646 = vmatpush.bf16.msra.mxu0 %v1496
  %1647 = vmatmul.bf16.gmra.mxu0 %v1079
  %v1648 = vpop.f32.mrf.mxu0
  %v1649 = vadd.f32 %v1636, %v1648
  %v1650 = vpop.f32.mrf.mxu0
  %1651 = vdwg.mxu0
  %1652 = vmatpush.bf16.msra.mxu0 %v1511
  %1653 = vmatpush.bf16.msra.mxu0 %v1510
  %1654 = vmatpush.bf16.msra.mxu0 %v1509
  %1655 = vmatpush.bf16.msra.mxu0 %v1508
  %1656 = vmatpush.bf16.msra.mxu0 %v1507
  %1657 = vmatpush.bf16.msra.mxu0 %v1506
  %1658 = vmatpush.bf16.msra.mxu0 %v1505
  %1659 = vmatpush.bf16.msra.mxu0 %v1504
  %1660 = vmatmul.bf16.gmra.mxu0 %v1080
  %v1661 = vpop.f32.mrf.mxu0
  %v1662 = vadd.f32 %v1649, %v1661
  %v1663 = vpop.f32.mrf.mxu0
  %1664 = vdwg.mxu0
  %1665 = vmatpush.bf16.msra.mxu0 %v1519
  %1666 = vmatpush.bf16.msra.mxu0 %v1518
  %1667 = vmatpush.bf16.msra.mxu0 %v1517
  %1668 = vmatpush.bf16.msra.mxu0 %v1516
  %1669 = vmatpush.bf16.msra.mxu0 %v1515
  %1670 = vmatpush.bf16.msra.mxu0 %v1514
  %1671 = vmatpush.bf16.msra.mxu0 %v1513
  %1672 = vmatpush.bf16.msra.mxu0 %v1512
  %1673 = vmatmul.bf16.gmra.mxu0 %v1081
  %v1674 = vpop.f32.mrf.mxu0
  %v1675 = vadd.f32 %v1662, %v1674
  %v1676 = vpop.f32.mrf.mxu0
  %1677 = vdwg.mxu0
  %1678 = vmatpush.bf16.msra.mxu0 %v1527
  %1679 = vmatpush.bf16.msra.mxu0 %v1526
  %1680 = vmatpush.bf16.msra.mxu0 %v1525
  %1681 = vmatpush.bf16.msra.mxu0 %v1524
  %1682 = vmatpush.bf16.msra.mxu0 %v1523
  %1683 = vmatpush.bf16.msra.mxu0 %v1522
  %1684 = vmatpush.bf16.msra.mxu0 %v1521
  %1685 = vmatpush.bf16.msra.mxu0 %v1520
  %1686 = vmatmul.bf16.gmra.mxu0 %v1082
  %v1687 = vpop.f32.mrf.mxu0
  %v1688 = vadd.f32 %v1675, %v1687
  %v1689 = vpop.f32.mrf.mxu0
  %1690 = vdwg.mxu0
  %1691 = vmatpush.bf16.msra.mxu0 %v1535
  %1692 = vmatpush.bf16.msra.mxu0 %v1534
  %1693 = vmatpush.bf16.msra.mxu0 %v1533
  %1694 = vmatpush.bf16.msra.mxu0 %v1532
  %1695 = vmatpush.bf16.msra.mxu0 %v1531
  %1696 = vmatpush.bf16.msra.mxu0 %v1530
  %1697 = vmatpush.bf16.msra.mxu0 %v1529
  %1698 = vmatpush.bf16.msra.mxu0 %v1528
  %1699 = vmatmul.bf16.gmra.mxu0 %v1083
  %v1700 = vpop.f32.mrf.mxu0
  %v1701 = vadd.f32 %v1688, %v1700
  %v1702 = vpop.f32.mrf.mxu0
  %1703 = vdwg.mxu0
  %v1704 = vmax.f32 %v1701, 0.0
  %v1705 = vld [vmem:[%s12] sm:$0x1]
  %v1707 = vperm.slane %v1705, 0
  %v1709 = vmul.f32 %v1704, %v1707
  %vm1710 = vcmask 1041408
  %v1711 = vsel %vm1710, %v1709, 0.0
  %1712 = vadd.xlane.f32.xlu0 %v1711
  %v1713 = vpop.xlane.xlu0 %1712
  %v1714 = vld [vmem:[#allocation3] sm:$0x1]
  %v1716 = vperm.slane %v1714, 0
  %v1718 = vadd.f32 %v1713, %v1716
  %vm1719 = vcmask 1024
  %1720 = vst.msk [vmem:[%s14] sm:$0x3] %vm1719, %v1718
  // Predicated region
  $region58: #{graph_model_forward.1} parent=0 // pred_check
    _
  $region59: #{graph_model_forward.1} parent=0 // pred_check_branch
    %1722 = sbr.rel (0) target = $region61
  $region60: #{graph_model_forward.1} parent=0 // pred_region
    _
  $region61: #{graph_model_forward.1} parent=0 // pred_fallthru
    _
  // Predicated region
  $region62: #{graph_model_forward.1} parent=0 // pred_check
    _
  $region63: #{graph_model_forward.1} parent=0 // pred_check_branch
    %1724 = sbr.rel (0) target = $region65
  $region64: #{graph_model_forward.1} parent=0 // pred_region
    _
  $region65: #{graph_model_forward.1} parent=0 // pred_fallthru
    _

</llo_original>
